<compile_context>
chip_gen: v7x
topology: tpu7x:2x2x1
jax: 0.10.0
libtpu: 0.0.40
codegen_flags: <defaults>
</compile_context>

<pallas_src>
import functools
import math

import jax
import jax.numpy as jnp
from jax.experimental import pallas as pl
from jax.experimental.pallas import tpu as pltpu

_RESIDENT_SUPPORT_BUDGET = 40 * 1024 * 1024   # bytes (counts 2x, conservative)
_VMEM_CAP = 48 * 1024 * 1024                  # safe on v7x's 64 MiB VMEM


def _round_up(v, m):
    return (v + m - 1) // m * m


# ---------------------------------------------------------------------------
# Kernel 1: support = x @ W     (M x K(=F_in) tiled, f32 VMEM accumulator)
# ---------------------------------------------------------------------------
def _support_kernel(x_ref, w_ref, sup_ref, acc_ref, *, compute_dtype):
    k = pl.program_id(1)

    @pl.when(k == 0)
    def _init():
        acc_ref[...] = jnp.zeros_like(acc_ref)

    acc_ref[...] += jnp.dot(
        x_ref[...].astype(compute_dtype),
        w_ref[...].astype(compute_dtype),
        preferred_element_type=jnp.float32,
    )

    @pl.when(k == pl.num_programs(1) - 1)
    def _store():
        sup_ref[...] = acc_ref[...].astype(sup_ref.dtype)


# ---------------------------------------------------------------------------
# Kernel 2: out = adj @ support + bias   (block-sparse over adj k-blocks,
#           accumulate directly into the VMEM-resident output block)
# ---------------------------------------------------------------------------
def _adj_kernel(ids_ref, cnt_ref, adj_ref, sup_ref, b_ref, out_ref, *,
                tile_k, sup_resident, compute_dtype):
    i = pl.program_id(0)
    k = pl.program_id(1)

    @pl.when(k == 0)
    def _init():
        out_ref[...] = jnp.broadcast_to(b_ref[...], out_ref.shape)

    @pl.when(k < cnt_ref[i])
    def _accumulate():
        a = adj_ref[...].astype(compute_dtype)
        if sup_resident:
            kb = ids_ref[i * pl.num_programs(1) + k]
            start = pl.multiple_of(kb * tile_k, 128)
            s = sup_ref[pl.ds(start, tile_k), :]
        else:
            s = sup_ref[...]
        out_ref[...] += jnp.dot(a, s.astype(compute_dtype),
                                preferred_element_type=jnp.float32)


@functools.partial(
    jax.jit, static_argnames=("tile_m", "tile_k", "use_bf16", "resident_support"))
def graph_convolution(adj, x, weight, bias, *, tile_m=512, tile_k=1024,
                      use_bf16=True, resident_support=None):
    """GraphConvolution forward: adj @ (x @ weight) + bias.

    adj: [N, N] dense adjacency (any float dtype; pre-casting it to bf16 once
    outside halves its HBM stream).  x: [N, F_in], weight: [F_in, F_out],
    bias: [F_out].  Returns [N, F_out] float32.

    use_bf16=True casts matmul inputs to bf16 in-kernel (f32 accumulation);
    set False to keep the inputs in their original precision.
    resident_support: None = auto (keep support VMEM-resident when it fits).
    """
    n, f_in = x.shape
    f_out = weight.shape[1]
    assert adj.shape == (n, n)

    compute_dtype = jnp.bfloat16 if use_bf16 else jnp.float32
    sup_dtype = compute_dtype

    # ---- tile selection: pad rows / cols independently (no lcm blow-up) ----
    n128 = _round_up(n, 128)
    tile_m = max(128, min(tile_m, n128))
    # v7x megacore: keep >= 2 row tiles when the problem allows it.
    while tile_m > 128 and _round_up(n, tile_m) // tile_m < 2:
        tile_m = max(128, tile_m // 2)
    tile_k = max(128, min(tile_k, n128))

    f_out_p = _round_up(f_out, 128)       # lane-dense output stores
    n_pm = _round_up(n, tile_m)           # rows of adj / out
    n_pk = _round_up(n, tile_k)           # cols of adj == rows of support
    nm, nk = n_pm // tile_m, n_pk // tile_k

    # Guard the support kernel against a huge (vocab-sized) resident weight.
    if f_in <= 2048:
        tile_fin, f_in_p = f_in, f_in
    else:
        tile_fin = 1024
        f_in_p = _round_up(f_in, tile_fin)

    # ---- zero-padding only; no dtype-conversion pass over adj -------------
    adj_p = jnp.pad(adj, ((0, n_pm - n), (0, n_pk - n)))
    x_p = jnp.pad(x, ((0, n_pk - n), (0, f_in_p - f_in)))
    w_p = jnp.pad(weight, ((0, f_in_p - f_in), (0, f_out_p - f_out)))
    b_p = jnp.pad(bias, (0, f_out_p - f_out)).reshape(1, f_out_p).astype(jnp.float32)

    # ---- kernel 1: support = x @ W -----------------------------------------
    tile_sup_m = math.gcd(tile_k, 512)    # divides tile_k, hence divides n_pk
    x_item = jnp.dtype(x.dtype).itemsize
    w_item = jnp.dtype(weight.dtype).itemsize
    sup_item = jnp.dtype(sup_dtype).itemsize
    sup_vmem = (2 * tile_sup_m * tile_fin * x_item
                + 2 * tile_fin * f_out_p * w_item
                + tile_sup_m * f_out_p * 4
                + 2 * tile_sup_m * f_out_p * sup_item)
    sup_vmem_limit = int(min(max(sup_vmem + (2 << 20), 32 << 20), _VMEM_CAP))

    support = pl.pallas_call(
        functools.partial(_support_kernel, compute_dtype=compute_dtype),
        out_shape=jax.ShapeDtypeStruct((n_pk, f_out_p), sup_dtype),
        grid_spec=pltpu.PrefetchScalarGridSpec(
            num_scalar_prefetch=0,
            grid=(n_pk // tile_sup_m, f_in_p // tile_fin),
            in_specs=[
                pl.BlockSpec((tile_sup_m, tile_fin), lambda i, k: (i, k)),
                pl.BlockSpec((tile_fin, f_out_p), lambda i, k: (k, 0)),
            ],
            out_specs=pl.BlockSpec((tile_sup_m, f_out_p), lambda i, k: (i, 0)),
            scratch_shapes=[pltpu.VMEM((tile_sup_m, f_out_p), jnp.float32)],
        ),
        compiler_params=pltpu.CompilerParams(
            dimension_semantics=("parallel", "arbitrary"),
            vmem_limit_bytes=sup_vmem_limit,
        ),
    )(x_p, w_p)

    # ---- block-sparsity structure of adj (nonzero k-block ids per row tile) -
    # TODO(synk): adj arrives as a sparse COO in the original; its block
    # structure (ids/counts) is static across layers/steps and could be
    # precomputed once from the COO pattern instead of re-derived here.
    nnz = jnp.any(adj_p.reshape(nm, tile_m, nk, tile_k) != 0, axis=(1, 3))  # [nm,nk]
    counts = nnz.sum(axis=1).astype(jnp.int32)                              # [nm]
    order = jnp.argsort(jnp.logical_not(nnz).astype(jnp.int32),
                        axis=1).astype(jnp.int32)                           # nnz first
    last_id = jnp.take_along_axis(order, jnp.maximum(counts - 1, 0)[:, None], axis=1)
    col = jnp.arange(nk, dtype=jnp.int32)[None, :]
    block_ids = jnp.where(col < counts[:, None], order, last_id).reshape(-1)

    # ---- VMEM budget / resident-support decision ---------------------------
    adj_item = jnp.dtype(adj.dtype).itemsize
    adj_tile_b = tile_m * tile_k * adj_item
    out_tile_b = tile_m * f_out_p * 4
    sup_full_b = n_pk * f_out_p * sup_item
    sup_tile_b = tile_k * f_out_p * sup_item

    resident_need = 2 * sup_full_b + 2 * adj_tile_b + 2 * out_tile_b
    if resident_support is None:
        sup_resident = resident_need <= _RESIDENT_SUPPORT_BUDGET
    else:
        sup_resident = bool(resident_support)
    need = resident_need if sup_resident else (
        2 * sup_tile_b + 2 * adj_tile_b + 2 * out_tile_b)
    vmem_limit = int(min(max(need + (2 << 20), 32 << 20), _VMEM_CAP))

    if sup_resident:
        sup_spec = pl.BlockSpec((n_pk, f_out_p), lambda i, k, ids, cnt: (0, 0))
    else:
        sup_spec = pl.BlockSpec(
            (tile_k, f_out_p), lambda i, k, ids, cnt: (ids[i * nk + k], 0))

    # ---- kernel 2: out = adj @ support + bias -------------------------------
    out = pl.pallas_call(
        functools.partial(_adj_kernel, tile_k=tile_k, sup_resident=sup_resident,
                          compute_dtype=compute_dtype),
        out_shape=jax.ShapeDtypeStruct((n_pm, f_out_p), jnp.float32),
        grid_spec=pltpu.PrefetchScalarGridSpec(
            num_scalar_prefetch=2,
            grid=(nm, nk),
            in_specs=[
                pl.BlockSpec((tile_m, tile_k),
                             lambda i, k, ids, cnt: (i, ids[i * nk + k])),
                sup_spec,
                pl.BlockSpec((1, f_out_p), lambda i, k, ids, cnt: (0, 0)),
            ],
            out_specs=pl.BlockSpec((tile_m, f_out_p),
                                   lambda i, k, ids, cnt: (i, 0)),
        ),
        compiler_params=pltpu.CompilerParams(
            dimension_semantics=("parallel", "arbitrary"),
            vmem_limit_bytes=vmem_limit,
        ),
    )(block_ids, counts, adj_p, support, b_p)

    return out[:n, :f_out]


def init_params(key, in_features, out_features):
    """Matches GraphConvolution.reset_parameters: U(-stdv, stdv), stdv = 1/sqrt(F_out)."""
    stdv = 1.0 / math.sqrt(out_features)
    kw, kb = jax.random.split(key)
    weight = jax.random.uniform(
        kw, (in_features, out_features), jnp.float32, minval=-stdv, maxval=stdv)
    bias = jax.random.uniform(
        kb, (out_features,), jnp.float32, minval=-stdv, maxval=stdv)
    return weight, bias


if __name__ == "__main__":
    key = jax.random.PRNGKey(0)

    # --- Test 1: dense adjacency, bf16 compute, padded (non-aligned) shapes --
    N, F_IN, F_OUT = 300, 96, 80
    k_adj, k_x, k_p, key = jax.random.split(key, 4)
    adj_raw = jax.random.uniform(k_adj, (N, N), jnp.float32)
    adj = adj_raw / jnp.sum(adj_raw, axis=1, keepdims=True)   # row-normalised
    x = jax.random.normal(k_x, (N, F_IN), jnp.float32)
    weight, bias = init_params(k_p, F_IN, F_OUT)

    out = jax.block_until_ready(graph_convolution(adj, x, weight, bias))
    ref = adj @ (x @ weight) + bias[None, :]
    assert out.shape == (N, F_OUT)
    assert jnp.allclose(out, ref, atol=2e-2, rtol=2e-2), float(
        jnp.max(jnp.abs(out - ref)))

    # --- Test 2: block-sparse adjacency, f32 streams, tiled-support path -----
    N2, F_IN2, F_OUT2 = 512, 48, 32
    k_adj2, k_x2, k_p2, key = jax.random.split(key, 4)
    blk = 128
    band = ((jnp.arange(N2)[:, None] // blk) >= (jnp.arange(N2)[None, :] // blk))
    adj2 = jax.random.uniform(k_adj2, (N2, N2), jnp.float32) * band
    adj2 = adj2 / jnp.sum(adj2, axis=1, keepdims=True)        # row-normalised
    x2 = jax.random.normal(k_x2, (N2, F_IN2), jnp.float32)
    w2, b2 = init_params(k_p2, F_IN2, F_OUT2)

    out2 = jax.block_until_ready(
        graph_convolution(adj2, x2, w2, b2, tile_m=128, tile_k=128,
                          use_bf16=False, resident_support=False))
    ref2 = adj2 @ (x2 @ w2) + b2[None, :]
    assert out2.shape == (N2, F_OUT2)
    assert jnp.allclose(out2, ref2, atol=2e-2, rtol=2e-2), float(
        jnp.max(jnp.abs(out2 - ref2)))

    print("KERNEL_OK")
</pallas_src>

<mosaic_0001>
module attributes {stable_mosaic.version = 11 : i64} {
  func.func @_support_kernel(%arg0: i32, %arg1: i32, %arg2: memref<128x96xf32, #tpu.memory_space<vmem>>, %arg3: memref<96x128xf32, #tpu.memory_space<vmem>>, %arg4: memref<128x128xbf16, #tpu.memory_space<vmem>>, %arg5: memref<128x128xf32, #tpu.memory_space<vmem>>) attributes {dimension_semantics = [#tpu.dimension_semantics<parallel>, #tpu.dimension_semantics<arbitrary>], iteration_bounds = array<i64: 3, 1>, scalar_prefetch = 0 : i64, scratch_operands = 1 : i64, tpu.core_type = #tpu.core_type<tc>, window_params = [{transform_indices = @transform_0, window_bounds = array<i64: 128, 96>}, {transform_indices = @transform_1, window_bounds = array<i64: 96, 128>}, {transform_indices = @transform_2, window_bounds = array<i64: 128, 128>}]} {
    %c0_i32 = arith.constant 0 : i32
    %0 = arith.cmpi eq, %arg1, %c0_i32 : i32
    %1 = arith.extui %0 : i1 to i32
    %c0_i32_0 = arith.constant 0 : i32
    %2 = arith.cmpi ne, %1, %c0_i32_0 : i32
    scf.if %2 {
      %cst_10 = arith.constant 0.000000e+00 : f32
      %14 = vector.broadcast %cst_10 : f32 to vector<128x128xf32>
      %c0_11 = arith.constant 0 : index
      %c0_12 = arith.constant 0 : index
      %15 = vector.load %arg5[%c0_11, %c0_12] : memref<128x128xf32, #tpu.memory_space<vmem>>, vector<128x128xf32>
      tpu.vector_store %arg5[%c0_11, %c0_12], %14 {strides = array<i32>} : memref<128x128xf32, #tpu.memory_space<vmem>>, vector<128x128xf32>,
    } else {
    }
    %c0 = arith.constant 0 : index
    %c0_1 = arith.constant 0 : index
    %3 = vector.load %arg5[%c0, %c0_1] : memref<128x128xf32, #tpu.memory_space<vmem>>, vector<128x128xf32>
    %c0_2 = arith.constant 0 : index
    %c0_3 = arith.constant 0 : index
    %4 = vector.load %arg2[%c0_2, %c0_3] : memref<128x96xf32, #tpu.memory_space<vmem>>, vector<128x96xf32>
    %5 = arith.truncf %4 : vector<128x96xf32> to vector<128x96xbf16>
    %c0_4 = arith.constant 0 : index
    %c0_5 = arith.constant 0 : index
    %6 = vector.load %arg3[%c0_4, %c0_5] : memref<96x128xf32, #tpu.memory_space<vmem>>, vector<96x128xf32>
    %7 = arith.truncf %6 : vector<96x128xf32> to vector<96x128xbf16>
    %cst = arith.constant dense<0.000000e+00> : vector<128x128xf32>
    %8 = tpu.matmul %5, %7, %cst {dimension_numbers = #tpu.dot_dimension_numbers<[1], [0], [0], [1], [0, 0, 1, 1], [], []>} : vector<128x96xbf16>, vector<96x128xbf16>, vector<128x128xf32> -> vector<128x128xf32>
    %9 = arith.addf %3, %8 : vector<128x128xf32>
    %c0_6 = arith.constant 0 : index
    %c0_7 = arith.constant 0 : index
    %10 = vector.load %arg5[%c0_6, %c0_7] : memref<128x128xf32, #tpu.memory_space<vmem>>, vector<128x128xf32>
    tpu.vector_store %arg5[%c0_6, %c0_7], %9 {strides = array<i32>} : memref<128x128xf32, #tpu.memory_space<vmem>>, vector<128x128xf32>,
    %c0_i32_8 = arith.constant 0 : i32
    %11 = arith.cmpi eq, %arg1, %c0_i32_8 : i32
    %12 = arith.extui %11 : i1 to i32
    %c0_i32_9 = arith.constant 0 : i32
    %13 = arith.cmpi ne, %12, %c0_i32_9 : i32
    scf.if %13 {
      %c0_10 = arith.constant 0 : index
      %c0_11 = arith.constant 0 : index
      %14 = vector.load %arg5[%c0_10, %c0_11] : memref<128x128xf32, #tpu.memory_space<vmem>>, vector<128x128xf32>
      %15 = arith.truncf %14 : vector<128x128xf32> to vector<128x128xbf16>
      %c0_12 = arith.constant 0 : index
      %c0_13 = arith.constant 0 : index
      %16 = vector.load %arg4[%c0_12, %c0_13] : memref<128x128xbf16, #tpu.memory_space<vmem>>, vector<128x128xbf16>
      tpu.vector_store %arg4[%c0_12, %c0_13], %15 {strides = array<i32>} : memref<128x128xbf16, #tpu.memory_space<vmem>>, vector<128x128xbf16>,
    } else {
    }
    return
  }
  func.func @transform_0(%arg0: i32, %arg1: i32) -> (i32, i32) {
    %c0_i32 = arith.constant 0 : i32
    return %arg0, %arg1 : i32, i32
  }
  func.func @transform_1(%arg0: i32, %arg1: i32) -> (i32, i32) {
    %c0_i32 = arith.constant 0 : i32
    %c0_i32_0 = arith.constant 0 : i32
    return %arg1, %c0_i32 : i32, i32
  }
  func.func @transform_2(%arg0: i32, %arg1: i32) -> (i32, i32) {
    %c0_i32 = arith.constant 0 : i32
    %c0_i32_0 = arith.constant 0 : i32
    return %arg0, %c0_i32 : i32, i32
  }
}

module attributes {stable_mosaic.version = 11 : i64} {
  func.func @_adj_kernel(%arg0: i32, %arg1: i32, %arg2: memref<2xi32, #tpu.memory_space<smem>>, %arg3: memref<2xi32, #tpu.memory_space<smem>>, %arg4: memref<192x384xf32, #tpu.memory_space<vmem>>, %arg5: memref<384x128xbf16, #tpu.memory_space<vmem>>, %arg6: memref<1x128xf32, #tpu.memory_space<vmem>>, %arg7: memref<192x128xf32, #tpu.memory_space<vmem>>) attributes {dimension_semantics = [#tpu.dimension_semantics<parallel>, #tpu.dimension_semantics<arbitrary>], iteration_bounds = array<i64: 2, 1>, scalar_prefetch = 2 : i64, scratch_operands = 0 : i64, tpu.core_type = #tpu.core_type<tc>, window_params = [{transform_indices = @transform_0, window_bounds = array<i64: 192, 384>}, {pipeline_mode = #tpu.pipeline_mode<synchronous>, transform_indices = @transform_1, window_bounds = array<i64: 384, 128>}, {pipeline_mode = #tpu.pipeline_mode<synchronous>, transform_indices = @transform_2, window_bounds = array<i64: 1, 128>}, {transform_indices = @transform_3, window_bounds = array<i64: 192, 128>}]} {
    %c0_i32 = arith.constant 0 : i32
    %0 = arith.cmpi eq, %arg1, %c0_i32 : i32
    %1 = arith.extui %0 : i1 to i32
    %c0_i32_0 = arith.constant 0 : i32
    %2 = arith.cmpi ne, %1, %c0_i32_0 : i32
    scf.if %2 {
      %c0 = arith.constant 0 : index
      %c0_2 = arith.constant 0 : index
      %8 = vector.load %arg6[%c0, %c0_2] : memref<1x128xf32, #tpu.memory_space<vmem>>, vector<1x128xf32>
      %9 = vector.shape_cast %8 : vector<1x128xf32> to vector<1x128xf32>
      %10 = vector.broadcast %9 : vector<1x128xf32> to vector<192x128xf32>
      %c0_3 = arith.constant 0 : index
      %c0_4 = arith.constant 0 : index
      %11 = vector.load %arg7[%c0_3, %c0_4] : memref<192x128xf32, #tpu.memory_space<vmem>>, vector<192x128xf32>
      tpu.vector_store %arg7[%c0_3, %c0_4], %10 {strides = array<i32>} : memref<192x128xf32, #tpu.memory_space<vmem>>, vector<192x128xf32>,
    } else {
    }
    %3 = arith.index_cast %arg0 : i32 to index
    %4 = memref.load %arg3[%3] : memref<2xi32, #tpu.memory_space<smem>>
    %5 = arith.cmpi slt, %arg1, %4 : i32
    %6 = arith.extui %5 : i1 to i32
    %c0_i32_1 = arith.constant 0 : i32
    %7 = arith.cmpi ne, %6, %c0_i32_1 : i32
    scf.if %7 {
      %c0 = arith.constant 0 : index
      %c0_2 = arith.constant 0 : index
      %8 = vector.load %arg4[%c0, %c0_2] : memref<192x384xf32, #tpu.memory_space<vmem>>, vector<192x384xf32>
      %9 = arith.truncf %8 : vector<192x384xf32> to vector<192x384xbf16>
      %c1_i32 = arith.constant 1 : i32
      %10 = arith.muli %arg0, %c1_i32 : i32
      %11 = arith.addi %10, %arg1 : i32
      %12 = arith.index_cast %11 : i32 to index
      %13 = memref.load %arg2[%12] : memref<2xi32, #tpu.memory_space<smem>>
      %c384_i32 = arith.constant 384 : i32
      %14 = arith.muli %13, %c384_i32 : i32
      %15 = tpu.assume_multiple %14, 128 : i32
      %16 = arith.index_cast %15 : i32 to index
      %c0_3 = arith.constant 0 : index
      %17 = vector.load %arg5[%16, %c0_3] : memref<384x128xbf16, #tpu.memory_space<vmem>>, vector<384x128xbf16>
      %c0_4 = arith.constant 0 : index
      %c0_5 = arith.constant 0 : index
      %18 = vector.load %arg7[%c0_4, %c0_5] : memref<192x128xf32, #tpu.memory_space<vmem>>, vector<192x128xf32>
      %cst = arith.constant dense<0.000000e+00> : vector<192x128xf32>
      %19 = tpu.matmul %9, %17, %cst {dimension_numbers = #tpu.dot_dimension_numbers<[1], [0], [0], [1], [0, 0, 1, 1], [], []>} : vector<192x384xbf16>, vector<384x128xbf16>, vector<192x128xf32> -> vector<192x128xf32>
      %20 = arith.addf %18, %19 : vector<192x128xf32>
      %c0_6 = arith.constant 0 : index
      %c0_7 = arith.constant 0 : index
      %21 = vector.load %arg7[%c0_6, %c0_7] : memref<192x128xf32, #tpu.memory_space<vmem>>, vector<192x128xf32>
      tpu.vector_store %arg7[%c0_6, %c0_7], %20 {strides = array<i32>} : memref<192x128xf32, #tpu.memory_space<vmem>>, vector<192x128xf32>,
    } else {
    }
    return
  }
  func.func @transform_0(%arg0: i32, %arg1: i32, %arg2: memref<2xi32, #tpu.memory_space<smem>>, %arg3: memref<2xi32, #tpu.memory_space<smem>>) -> (i32, i32) {
    %c1_i32 = arith.constant 1 : i32
    %0 = arith.muli %arg0, %c1_i32 : i32
    %1 = arith.addi %0, %arg1 : i32
    %2 = arith.index_cast %1 : i32 to index
    %3 = memref.load %arg2[%2] : memref<2xi32, #tpu.memory_space<smem>>
    %c0_i32 = arith.constant 0 : i32
    return %arg0, %3 : i32, i32
  }
  func.func @transform_1(%arg0: i32, %arg1: i32, %arg2: memref<2xi32, #tpu.memory_space<smem>>, %arg3: memref<2xi32, #tpu.memory_space<smem>>) -> (i32, i32) {
    %c0_i32 = arith.constant 0 : i32
    %c0_i32_0 = arith.constant 0 : i32
    %c0_i32_1 = arith.constant 0 : i32
    return %c0_i32, %c0_i32_0 : i32, i32
  }
  func.func @transform_2(%arg0: i32, %arg1: i32, %arg2: memref<2xi32, #tpu.memory_space<smem>>, %arg3: memref<2xi32, #tpu.memory_space<smem>>) -> (i32, i32) {
    %c0_i32 = arith.constant 0 : i32
    %c0_i32_0 = arith.constant 0 : i32
    %c0_i32_1 = arith.constant 0 : i32
    return %c0_i32, %c0_i32_0 : i32, i32
  }
  func.func @transform_3(%arg0: i32, %arg1: i32, %arg2: memref<2xi32, #tpu.memory_space<smem>>, %arg3: memref<2xi32, #tpu.memory_space<smem>>) -> (i32, i32) {
    %c0_i32 = arith.constant 0 : i32
    %c0_i32_0 = arith.constant 0 : i32
    return %arg0, %c0_i32 : i32, i32
  }
}

</mosaic_0001>

<llo_original>
// kernel: graph_convolution.2
$region0: #{graph_convolution.2}
  #allocation0 [shape = 'u32[]', space=smem, size = 0x4, offset = 0x4, fixed_abs, tag = 'smem constant byte address 0x4 - core index']
  #allocation1 [shape = 'u32[144,128]{1,0:T(1,128)}', space=vmem, size = 0x12000, scoped, tag = 'internal scratch']
  #allocation2 [shape = 'f32[128,128]{1,0:T(8,128)}', space=vmem, size = 0x10000, scoped, tag = 'scratch operand']
  %s0 = inlined_call_operand.vmem [shape: f32[384,96], index: 0, kind: input, shape index: {}]
  %s1 = inlined_call_operand.vmem [shape: f32[96,128], index: 1, kind: input, shape index: {}]
  %s2 = inlined_call_operand.vmem [shape: bf16[384,128], index: 2, kind: output, shape index: {}]
  %s3 = sld [smem:[#allocation0]]
  $region49: #{graph_convolution.2} parent=0
    _
  %s5 = ssub.s32 1, %s3
  %s6 = scalar_select 0, %s5, %s3
  loop: start=0, step=1, limit=5
  $region2: #{graph_convolution.2} parent=0 // loop_pre_header
    _
  $region3: #{graph_convolution.2} parent=0 // loop_header
    %s8 = sphi 0, %s12
    %p9 = scmp.ge.s32.totalorder %s8, 5
    %s15 = sphi 0, %s27
    %s16 = sphi 0, %s23
    %s17 = sphi 0, %s15
    %s18 = sphi 0, %s16
    %s19 = sphi 0, %s17
    %s20 = sphi 0, %s18
    %s32 = sphi 0, %s34
    %s35 = sphi 0, %s32
    %s36 = sphi 0, %s35
    %s52 = sphi 0, %s36
    %s58 = sphi 0, %s60
    %s61 = sphi 0, %s58
    %s62 = sphi 0, %s61
    %s78 = sphi 0, %s62
    %s84 = sphi 0, %s86
    %s87 = sphi 0, %s84
    %s88 = sphi 0, %s87
    %s104 = sphi 0, %s88
  $region4: #{graph_convolution.2} parent=0 // loop_header_branch
    %11 = sbr.rel (%p9) target = $region8
  $region5: #{graph_convolution.2} parent=0 // loop_body
    %s13 = ssub.s32 %s8, 1
    %s14 = ssub.s32 %s8, 2
    %s21 = sadd.s32 1, %s16
    %p22 = scmp.ge.s32.totalorder %s21, 1
    %s23 = scalar_select %p22, 0, %s21
    %s24 = sadd.s32 1, %s15
    %s25 = scalar_select %p22, %s24, %s15
    %p26 = scmp.ge.s32.totalorder %s25, 3
    %s27 = scalar_select %p26, 0, %s25
    %s28 = ssub.s32 %s15, %s27
    %s29 = ssub.s32 %s16, %s23
    %s30 = sor.u32 %s28, %s29
    %p31 = scmp.eq.s32.totalorder %s30, 0
    %s33 = sadd.s32 %s32, 1
    %s34 = scalar_select %p31, %s32, %s33
    %p37 = pneg %p31
    %p38 = scmp.eq.s32.totalorder %s8, 2
    %p39 = por %p37, %p38
    %p40 = scmp.ne.s32.totalorder %s32, %s35
    %p41 = scmp.eq.s32.totalorder %s8, 0
    %p42 = por %p40, %p41
    %p43 = scmp.ne.s32.totalorder %s32, %s35
    %p44 = scmp.eq.s32.totalorder %s13, 2
    %p45 = por %p43, %p44
    %p46 = scmp.ne.s32.totalorder %s35, %s36
    %p47 = scmp.eq.s32.totalorder %s13, 0
    %p48 = por %p46, %p47
    %p49 = scmp.ne.s32.totalorder %s35, %s36
    %p50 = scmp.eq.s32.totalorder %s14, 2
    %p51 = por %p49, %p50
    %p53 = scmp.ne.s32.totalorder %s36, %s52
    %p54 = scmp.eq.s32.totalorder %s14, 0
    %p55 = por %p53, %p54
    %s56 = ssub.s32 %s16, %s23
    %p57 = scmp.eq.s32.totalorder %s56, 0
    %s59 = sadd.s32 %s58, 1
    %s60 = scalar_select %p57, %s58, %s59
    %p63 = pneg %p57
    %p64 = scmp.eq.s32.totalorder %s8, 2
    %p65 = por %p63, %p64
    %p66 = scmp.ne.s32.totalorder %s58, %s61
    %p67 = scmp.eq.s32.totalorder %s8, 0
    %p68 = por %p66, %p67
    %p69 = scmp.ne.s32.totalorder %s58, %s61
    %p70 = scmp.eq.s32.totalorder %s13, 2
    %p71 = por %p69, %p70
    %p72 = scmp.ne.s32.totalorder %s61, %s62
    %p73 = scmp.eq.s32.totalorder %s13, 0
    %p74 = por %p72, %p73
    %p75 = scmp.ne.s32.totalorder %s61, %s62
    %p76 = scmp.eq.s32.totalorder %s14, 2
    %p77 = por %p75, %p76
    %p79 = scmp.ne.s32.totalorder %s62, %s78
    %p80 = scmp.eq.s32.totalorder %s14, 0
    %p81 = por %p79, %p80
    %s82 = ssub.s32 %s15, %s27
    %p83 = scmp.eq.s32.totalorder %s82, 0
    %s85 = sadd.s32 %s84, 1
    %s86 = scalar_select %p83, %s84, %s85
    %p89 = pneg %p83
    %p90 = scmp.eq.s32.totalorder %s8, 2
    %p91 = por %p89, %p90
    %p92 = scmp.ne.s32.totalorder %s84, %s87
    %p93 = scmp.eq.s32.totalorder %s8, 0
    %p94 = por %p92, %p93
    %p95 = scmp.ne.s32.totalorder %s84, %s87
    %p96 = scmp.eq.s32.totalorder %s13, 2
    %p97 = por %p95, %p96
    %p98 = scmp.ne.s32.totalorder %s87, %s88
    %p99 = scmp.eq.s32.totalorder %s13, 0
    %p100 = por %p98, %p99
    %p101 = scmp.ne.s32.totalorder %s87, %s88
    %p102 = scmp.eq.s32.totalorder %s14, 2
    %p103 = por %p101, %p102
    %p105 = scmp.ne.s32.totalorder %s88, %s104
    %p106 = scmp.eq.s32.totalorder %s14, 0
    %p107 = por %p105, %p106
    %p108 = scmp.le.s32.totalorder 1, %s8
    %p109 = scmp.lt.s32.totalorder %s8, 4
    %p110 = pnand %p108, %p109
    %p111 = pneg %p110
    // Predicated region
    $region9: #{graph_convolution.2} parent=5 // pred_check
      _
    $region10: #{graph_convolution.2} parent=5 // pred_check_branch
      %113 = sbr.rel (%p110) target = $region12
    $region11: #{graph_convolution.2} parent=5 // pred_region
      %s114 = ssub.s32 %s8, 1
      // Predicated region
      $region13: #{graph_convolution.2} parent=11 // pred_check
        %p115 = pneg %p74
      $region14: #{graph_convolution.2} parent=11 // pred_check_branch
        %117 = sbr.rel (%p115) target = $region16
      $region15: #{graph_convolution.2} parent=11 // pred_region
        %s118 = smul.u32 12, %s18
        %p119 = scmp.lt.s32.totalorder %s118, 11
        %s120 = scalar_select %p119, %s118, 11
        %s121 = smul.addr %s120, 8
        %s122 = scalar_lea.vmem %s1, %s121
        %s123 = smul.u32 12, %s18
      $region16: #{graph_convolution.2} parent=11 // pred_fallthru
        _
    $region12: #{graph_convolution.2} parent=5 // pred_fallthru
      _
    %p124 = scmp.lt.s32.totalorder %s8, 3
    // Predicated region
    $region17: #{graph_convolution.2} parent=5 // pred_check
      %p125 = pneg %p124
    $region18: #{graph_convolution.2} parent=5 // pred_check_branch
      %127 = sbr.rel (%p125) target = $region20
    $region19: #{graph_convolution.2} parent=5 // pred_region
      // Predicated region
      $region21: #{graph_convolution.2} parent=19 // pred_check
        %p128 = pneg %p42
      $region22: #{graph_convolution.2} parent=19 // pred_check_branch
        %130 = sbr.rel (%p128) target = $region24
      $region23: #{graph_convolution.2} parent=19 // pred_region
        %s131 = smul.u32 16, %s15
        %p132 = scmp.lt.s32.totalorder %s131, 47
        %s133 = scalar_select %p132, %s131, 47
        %p134 = scmp.lt.s32.totalorder %s16, 0
        %s135 = scalar_select %p134, %s16, 0
        %s136 = sadd.s32 %s135, %s133
        %s137 = smul.addr %s136, 8
        %s138 = scalar_lea.vmem %s0, %s137
        %s139 = smul.u32 16, %s15
      $region24: #{graph_convolution.2} parent=19 // pred_fallthru
        _
    $region20: #{graph_convolution.2} parent=5 // pred_fallthru
      _
    %p140 = scmp.le.s32.totalorder 1, %s8
    %p141 = scmp.lt.s32.totalorder %s8, 4
    %p142 = pnand %p140, %p141
    %p143 = pneg %p142
    // Predicated region
    $region25: #{graph_convolution.2} parent=5 // pred_check
      _
    $region26: #{graph_convolution.2} parent=5 // pred_check_branch
      %145 = sbr.rel (%p142) target = $region28
    $region27: #{graph_convolution.2} parent=5 // pred_region
      %s146 = ssub.s32 %s8, 1
      %s147 = smul.u32 16, %s17
      %p148 = scmp.lt.s32.totalorder %s147, 47
      %s149 = scalar_select %p148, %s147, 47
      %p150 = scmp.lt.s32.totalorder %s18, 0
      %s151 = scalar_select %p150, %s18, 0
      %s152 = sadd.s32 %s151, %s149
      %s153 = smul.addr %s152, 8
      %s154 = scalar_lea.vmem %s0, %s153
      %p155 = pneg %p48
      %p156 = pneg %p45
      %s157 = smul.u32 12, %s18
      %p158 = scmp.lt.s32.totalorder %s157, 11
      %s159 = scalar_select %p158, %s157, 11
      %s160 = smul.addr %s159, 8
      %s161 = scalar_lea.vmem %s1, %s160
      %p162 = pneg %p74
      %p163 = pneg %p71
      %p164 = pneg %p100
      %p165 = pneg %p97
      %s166 = smul.u32 16, %s17
      %p167 = scmp.lt.s32.totalorder %s166, 47
      %s168 = scalar_select %p167, %s166, 47
      %s169 = smul.addr %s168, 4
      %s170 = scalar_lea.vmem %s2, %s169
      %s171 = smul.u32 16, %s17
      %p172 = scmp.lt.s32.totalorder %s171, 47
      %s173 = scalar_select %p172, %s171, 47
      %p174 = scmp.lt.s32.totalorder %s18, 0
      %s175 = scalar_select %p174, %s18, 0
      %s176 = sadd.s32 %s175, %s173
      %s177 = smul.addr %s176, 8
      %s178 = scalar_lea.vmem %s0, %s177
      %s179 = smul.u32 16, %s17
      %s180 = smul.u32 12, %s18
      %p181 = scmp.lt.s32.totalorder %s180, 11
      %s182 = scalar_select %p181, %s180, 11
      %s183 = smul.addr %s182, 8
      %s184 = scalar_lea.vmem %s1, %s183
      %s185 = smul.u32 12, %s18
      %s186 = smul.u32 16, %s17
      %p187 = scmp.lt.s32.totalorder %s186, 47
      %s188 = scalar_select %p187, %s186, 47
      %s189 = smul.addr %s188, 4
      %s190 = scalar_lea.vmem %s2, %s189
      %s191 = smul.u32 16, %s17
      %p193 = scmp.eq.s32.totalorder %s18, 0
      // Predicated region
      $region29: #{graph_convolution.2} parent=27 // pred_check
        %p194 = pneg %p193
      $region30: #{graph_convolution.2} parent=27 // pred_check_branch
        %196 = sbr.rel (%p194) target = $region32
      $region31: #{graph_convolution.2} parent=27 // pred_region
        %197 = vst [vmem:[#allocation2] sm:$0xff] 0.0
        %198 = vst [vmem:[#allocation2 + $0x8] sm:$0xff] 0.0
        %199 = vst [vmem:[#allocation2 + $0x10] sm:$0xff] 0.0
        %200 = vst [vmem:[#allocation2 + $0x18] sm:$0xff] 0.0
        %201 = vst [vmem:[#allocation2 + $0x20] sm:$0xff] 0.0
        %202 = vst [vmem:[#allocation2 + $0x28] sm:$0xff] 0.0
        %203 = vst [vmem:[#allocation2 + $0x30] sm:$0xff] 0.0
        %204 = vst [vmem:[#allocation2 + $0x38] sm:$0xff] 0.0
        %205 = vst [vmem:[#allocation2 + $0x40] sm:$0xff] 0.0
        %206 = vst [vmem:[#allocation2 + $0x48] sm:$0xff] 0.0
        %207 = vst [vmem:[#allocation2 + $0x50] sm:$0xff] 0.0
        %208 = vst [vmem:[#allocation2 + $0x58] sm:$0xff] 0.0
        %209 = vst [vmem:[#allocation2 + $0x60] sm:$0xff] 0.0
        %210 = vst [vmem:[#allocation2 + $0x68] sm:$0xff] 0.0
        %211 = vst [vmem:[#allocation2 + $0x70] sm:$0xff] 0.0
        %212 = vst [vmem:[#allocation2 + $0x78] sm:$0xff] 0.0
      $region32: #{graph_convolution.2} parent=27 // pred_fallthru
        _
      %v213 = vld [vmem:[#allocation2] sm:$0xff]
      %v214 = vld [vmem:[#allocation2 + $0x8] sm:$0xff]
      %v215 = vld [vmem:[#allocation2 + $0x10] sm:$0xff]
      %v216 = vld [vmem:[#allocation2 + $0x18] sm:$0xff]
      %v217 = vld [vmem:[#allocation2 + $0x20] sm:$0xff]
      %v218 = vld [vmem:[#allocation2 + $0x28] sm:$0xff]
      %v219 = vld [vmem:[#allocation2 + $0x30] sm:$0xff]
      %v220 = vld [vmem:[#allocation2 + $0x38] sm:$0xff]
      %v221 = vld [vmem:[#allocation2 + $0x40] sm:$0xff]
      %v222 = vld [vmem:[#allocation2 + $0x48] sm:$0xff]
      %v223 = vld [vmem:[#allocation2 + $0x50] sm:$0xff]
      %v224 = vld [vmem:[#allocation2 + $0x58] sm:$0xff]
      %v225 = vld [vmem:[#allocation2 + $0x60] sm:$0xff]
      %v226 = vld [vmem:[#allocation2 + $0x68] sm:$0xff]
      %v227 = vld [vmem:[#allocation2 + $0x70] sm:$0xff]
      %v228 = vld [vmem:[#allocation2 + $0x78] sm:$0xff]
      %v229 = vld [vmem:[%s178] sm:$0xff]
      %v230 = vld [vmem:[%s178 + $0x8] sm:$0xff]
      %v231 = vld [vmem:[%s178 + $0x10] sm:$0xff]
      %v232 = vld [vmem:[%s178 + $0x18] sm:$0xff]
      %v233 = vld [vmem:[%s178 + $0x20] sm:$0xff]
      %v234 = vld [vmem:[%s178 + $0x28] sm:$0xff]
      %v235 = vld [vmem:[%s178 + $0x30] sm:$0xff]
      %v236 = vld [vmem:[%s178 + $0x38] sm:$0xff]
      %v237 = vld [vmem:[%s178 + $0x40] sm:$0xff]
      %v238 = vld [vmem:[%s178 + $0x48] sm:$0xff]
      %v239 = vld [vmem:[%s178 + $0x50] sm:$0xff]
      %v240 = vld [vmem:[%s178 + $0x58] sm:$0xff]
      %v241 = vld [vmem:[%s178 + $0x60] sm:$0xff]
      %v242 = vld [vmem:[%s178 + $0x68] sm:$0xff]
      %v243 = vld [vmem:[%s178 + $0x70] sm:$0xff]
      %v244 = vld [vmem:[%s178 + $0x78] sm:$0xff]
      %v245 = vpack.c.bf16 %v230, %v229
      %v246 = vpack.c.bf16 %v232, %v231
      %v247 = vpack.c.bf16 %v234, %v233
      %v248 = vpack.c.bf16 %v236, %v235
      %v249 = vpack.c.bf16 %v238, %v237
      %v250 = vpack.c.bf16 %v240, %v239
      %v251 = vpack.c.bf16 %v242, %v241
      %v252 = vpack.c.bf16 %v244, %v243
      %v253 = vld [vmem:[%s184] sm:$0xff]
      %v254 = vld [vmem:[%s184 + $0x8] sm:$0xff]
      %v255 = vld [vmem:[%s184 + $0x10] sm:$0xff]
      %v256 = vld [vmem:[%s184 + $0x18] sm:$0xff]
      %v257 = vld [vmem:[%s184 + $0x20] sm:$0xff]
      %v258 = vld [vmem:[%s184 + $0x28] sm:$0xff]
      %v259 = vld [vmem:[%s184 + $0x30] sm:$0xff]
      %v260 = vld [vmem:[%s184 + $0x38] sm:$0xff]
      %v261 = vld [vmem:[%s184 + $0x40] sm:$0xff]
      %v262 = vld [vmem:[%s184 + $0x48] sm:$0xff]
      %v263 = vld [vmem:[%s184 + $0x50] sm:$0xff]
      %v264 = vld [vmem:[%s184 + $0x58] sm:$0xff]
      %v265 = vpack.c.bf16 %v254, %v253
      %v266 = vpack.c.bf16 %v256, %v255
      %v267 = vpack.c.bf16 %v258, %v257
      %v268 = vpack.c.bf16 %v260, %v259
      %v269 = vpack.c.bf16 %v262, %v261
      %v270 = vpack.c.bf16 %v264, %v263
      %vm271 = vcmask 785408
      %v273 = vsel %vm271, %v245, 0
      %v276 = vsel %vm271, %v246, 0
      %v279 = vsel %vm271, %v247, 0
      %v282 = vsel %vm271, %v248, 0
      %v285 = vsel %vm271, %v249, 0
      %v288 = vsel %vm271, %v250, 0
      %v291 = vsel %vm271, %v251, 0
      %v294 = vsel %vm271, %v252, 0
      %296 = vmatprep.subr.bf16.mxu0 0
      %297 = vmatpush1.bf16.msra.mxu0 %v265
      %298 = vmatprep.subr.bf16.mxu0 0
      %299 = vmatpush1.bf16.msra.mxu0 %v266
      %300 = vmatprep.subr.bf16.mxu0 0
      %301 = vmatpush1.bf16.msra.mxu0 %v267
      %302 = vmatprep.subr.bf16.mxu0 0
      %303 = vmatpush1.bf16.msra.mxu0 %v268
      %304 = vmatprep.subr.bf16.mxu0 0
      %305 = vmatpush1.bf16.msra.mxu0 %v269
      %306 = vmatprep.subr.bf16.mxu0 0
      %307 = vmatpush1.bf16.msra.mxu0 %v270
      %308 = vmatprep.subr.bf16.mxu0 0
      %309 = vmatpush1.bf16.msra.mxu0 0
      %310 = vmatprep.subr.bf16.mxu0 0
      %311 = vmatpush1.bf16.msra.mxu0 0
      %312 = vmatprep.subr.bf16.mxu0 0
      %313 = vmatpush1.bf16.msra.mxu0 0
      %314 = vmatprep.subr.bf16.mxu0 0
      %315 = vmatpush1.bf16.msra.mxu0 0
      %316 = vmatprep.subr.bf16.mxu0 0
      %317 = vmatpush1.bf16.msra.mxu0 0
      %318 = vmatprep.subr.bf16.mxu0 0
      %319 = vmatpush1.bf16.msra.mxu0 0
      %320 = vmatprep.subr.bf16.mxu0 0
      %321 = vmatpush1.bf16.msra.mxu0 0
      %322 = vmatprep.subr.bf16.mxu0 0
      %323 = vmatpush1.bf16.msra.mxu0 0
      %324 = vmatprep.subr.bf16.mxu0 0
      %325 = vmatpush1.bf16.msra.mxu0 0
      %326 = vmatprep.subr.bf16.mxu0 0
      %327 = vmatpush1.bf16.msra.mxu0 0
      %328 = vmatprep.mubr.bf16.mxu0 0
      %329 = vmatmul.mubr.bf16.gmra.mrb[0].mxu0 %v273
      %v330 = vpop.f32.mrb[0].mxu0
      %v331 = vadd.f32 0.0, %v330
      %v332 = vpop.f32.mrb[0].mxu0
      %v333 = vpop.f32.mrb[0].mxu0
      %v334 = vadd.f32 0.0, %v333
      %v335 = vpop.f32.mrb[0].mxu0
      %336 = vmatprep.mubr.bf16.mxu0 0
      %337 = vmatmul.mubr.bf16.gmra.mrb[0].mxu0 %v276
      %v338 = vpop.f32.mrb[0].mxu0
      %v339 = vadd.f32 0.0, %v338
      %v340 = vpop.f32.mrb[0].mxu0
      %v341 = vpop.f32.mrb[0].mxu0
      %v342 = vadd.f32 0.0, %v341
      %v343 = vpop.f32.mrb[0].mxu0
      %344 = vmatprep.mubr.bf16.mxu0 0
      %345 = vmatmul.mubr.bf16.gmra.mrb[0].mxu0 %v279
      %v346 = vpop.f32.mrb[0].mxu0
      %v347 = vadd.f32 0.0, %v346
      %v348 = vpop.f32.mrb[0].mxu0
      %v349 = vpop.f32.mrb[0].mxu0
      %v350 = vadd.f32 0.0, %v349
      %v351 = vpop.f32.mrb[0].mxu0
      %352 = vmatprep.mubr.bf16.mxu0 0
      %353 = vmatmul.mubr.bf16.gmra.mrb[0].mxu0 %v282
      %v354 = vpop.f32.mrb[0].mxu0
      %v355 = vadd.f32 0.0, %v354
      %v356 = vpop.f32.mrb[0].mxu0
      %v357 = vpop.f32.mrb[0].mxu0
      %v358 = vadd.f32 0.0, %v357
      %v359 = vpop.f32.mrb[0].mxu0
      %360 = vmatprep.mubr.bf16.mxu0 0
      %361 = vmatmul.mubr.bf16.gmra.mrb[0].mxu0 %v285
      %v362 = vpop.f32.mrb[0].mxu0
      %v363 = vadd.f32 0.0, %v362
      %v364 = vpop.f32.mrb[0].mxu0
      %v365 = vpop.f32.mrb[0].mxu0
      %v366 = vadd.f32 0.0, %v365
      %v367 = vpop.f32.mrb[0].mxu0
      %368 = vmatprep.mubr.bf16.mxu0 0
      %369 = vmatmul.mubr.bf16.gmra.mrb[0].mxu0 %v288
      %v370 = vpop.f32.mrb[0].mxu0
      %v371 = vadd.f32 0.0, %v370
      %v372 = vpop.f32.mrb[0].mxu0
      %v373 = vpop.f32.mrb[0].mxu0
      %v374 = vadd.f32 0.0, %v373
      %v375 = vpop.f32.mrb[0].mxu0
      %376 = vmatprep.mubr.bf16.mxu0 0
      %377 = vmatmul.mubr.bf16.gmra.mrb[0].mxu0 %v291
      %v378 = vpop.f32.mrb[0].mxu0
      %v379 = vadd.f32 0.0, %v378
      %v380 = vpop.f32.mrb[0].mxu0
      %v381 = vpop.f32.mrb[0].mxu0
      %v382 = vadd.f32 0.0, %v381
      %v383 = vpop.f32.mrb[0].mxu0
      %384 = vmatprep.mubr.bf16.mxu0 0
      %385 = vmatmul.mubr.bf16.gmra.mrb[0].mxu0 %v294
      %v386 = vpop.f32.mrb[0].mxu0
      %v387 = vadd.f32 0.0, %v386
      %v388 = vpop.f32.mrb[0].mxu0
      %v389 = vpop.f32.mrb[0].mxu0
      %v390 = vadd.f32 0.0, %v389
      %v391 = vpop.f32.mrb[0].mxu0
      %392 = vdwg.mxu0
      %v393 = vadd.f32 %v213, %v331
      %v394 = vadd.f32 %v214, %v334
      %v395 = vadd.f32 %v215, %v339
      %v396 = vadd.f32 %v216, %v342
      %v397 = vadd.f32 %v217, %v347
      %v398 = vadd.f32 %v218, %v350
      %v399 = vadd.f32 %v219, %v355
      %v400 = vadd.f32 %v220, %v358
      %v401 = vadd.f32 %v221, %v363
      %v402 = vadd.f32 %v222, %v366
      %v403 = vadd.f32 %v223, %v371
      %v404 = vadd.f32 %v224, %v374
      %v405 = vadd.f32 %v225, %v379
      %v406 = vadd.f32 %v226, %v382
      %v407 = vadd.f32 %v227, %v387
      %v408 = vadd.f32 %v228, %v390
      %409 = vst [vmem:[#allocation2] sm:$0xff] %v393
      %410 = vst [vmem:[#allocation2 + $0x8] sm:$0xff] %v394
      %411 = vst [vmem:[#allocation2 + $0x10] sm:$0xff] %v395
      %412 = vst [vmem:[#allocation2 + $0x18] sm:$0xff] %v396
      %413 = vst [vmem:[#allocation2 + $0x20] sm:$0xff] %v397
      %414 = vst [vmem:[#allocation2 + $0x28] sm:$0xff] %v398
      %415 = vst [vmem:[#allocation2 + $0x30] sm:$0xff] %v399
      %416 = vst [vmem:[#allocation2 + $0x38] sm:$0xff] %v400
      %417 = vst [vmem:[#allocation2 + $0x40] sm:$0xff] %v401
      %418 = vst [vmem:[#allocation2 + $0x48] sm:$0xff] %v402
      %419 = vst [vmem:[#allocation2 + $0x50] sm:$0xff] %v403
      %420 = vst [vmem:[#allocation2 + $0x58] sm:$0xff] %v404
      %421 = vst [vmem:[#allocation2 + $0x60] sm:$0xff] %v405
      %422 = vst [vmem:[#allocation2 + $0x68] sm:$0xff] %v406
      %423 = vst [vmem:[#allocation2 + $0x70] sm:$0xff] %v407
      %424 = vst [vmem:[#allocation2 + $0x78] sm:$0xff] %v408
      // Predicated region
      $region33: #{graph_convolution.2} parent=27 // pred_check
        %p425 = pneg %p193
      $region34: #{graph_convolution.2} parent=27 // pred_check_branch
        %427 = sbr.rel (%p425) target = $region36
      $region35: #{graph_convolution.2} parent=27 // pred_region
        %v428 = vld [vmem:[#allocation2] sm:$0xff]
        %v429 = vld [vmem:[#allocation2 + $0x8] sm:$0xff]
        %v430 = vld [vmem:[#allocation2 + $0x10] sm:$0xff]
        %v431 = vld [vmem:[#allocation2 + $0x18] sm:$0xff]
        %v432 = vld [vmem:[#allocation2 + $0x20] sm:$0xff]
        %v433 = vld [vmem:[#allocation2 + $0x28] sm:$0xff]
        %v434 = vld [vmem:[#allocation2 + $0x30] sm:$0xff]
        %v435 = vld [vmem:[#allocation2 + $0x38] sm:$0xff]
        %v436 = vld [vmem:[#allocation2 + $0x40] sm:$0xff]
        %v437 = vld [vmem:[#allocation2 + $0x48] sm:$0xff]
        %v438 = vld [vmem:[#allocation2 + $0x50] sm:$0xff]
        %v439 = vld [vmem:[#allocation2 + $0x58] sm:$0xff]
        %v440 = vld [vmem:[#allocation2 + $0x60] sm:$0xff]
        %v441 = vld [vmem:[#allocation2 + $0x68] sm:$0xff]
        %v442 = vld [vmem:[#allocation2 + $0x70] sm:$0xff]
        %v443 = vld [vmem:[#allocation2 + $0x78] sm:$0xff]
        %v444 = vpack.c.bf16 %v429, %v428
        %v445 = vpack.c.bf16 %v431, %v430
        %v446 = vpack.c.bf16 %v433, %v432
        %v447 = vpack.c.bf16 %v435, %v434
        %v448 = vpack.c.bf16 %v437, %v436
        %v449 = vpack.c.bf16 %v439, %v438
        %v450 = vpack.c.bf16 %v441, %v440
        %v451 = vpack.c.bf16 %v443, %v442
        %v460 = vunpack.c.l.b16 %v444
        %v461 = vunpack.c.h.b16 %v444
        %v462 = vunpack.c.l.b16 %v445
        %v463 = vunpack.c.h.b16 %v445
        %v464 = vunpack.c.l.b16 %v446
        %v465 = vunpack.c.h.b16 %v446
        %v466 = vunpack.c.l.b16 %v447
        %v467 = vunpack.c.h.b16 %v447
        %v468 = vunpack.c.l.b16 %v448
        %v469 = vunpack.c.h.b16 %v448
        %v470 = vunpack.c.l.b16 %v449
        %v471 = vunpack.c.h.b16 %v449
        %v472 = vunpack.c.l.b16 %v450
        %v473 = vunpack.c.h.b16 %v450
        %v474 = vunpack.c.l.b16 %v451
        %v475 = vunpack.c.h.b16 %v451
        %v476 = vpack.c.b16 %v460, %v460
        %v477 = vpack.c.b16 %v461, %v461
        %v478 = vpack.c.b16 %v462, %v462
        %v479 = vpack.c.b16 %v463, %v463
        %v480 = vpack.c.b16 %v464, %v464
        %v481 = vpack.c.b16 %v465, %v465
        %v482 = vpack.c.b16 %v466, %v466
        %v483 = vpack.c.b16 %v467, %v467
        %v484 = vpack.c.b16 %v468, %v468
        %v485 = vpack.c.b16 %v469, %v469
        %v486 = vpack.c.b16 %v470, %v470
        %v487 = vpack.c.b16 %v471, %v471
        %v488 = vpack.c.b16 %v472, %v472
        %v489 = vpack.c.b16 %v473, %v473
        %v490 = vpack.c.b16 %v474, %v474
        %v491 = vpack.c.b16 %v475, %v475
        %508 = vst [vmem:[%s190] sm:$0xf] %v476
        %509 = vst [vmem:[%s190 + $0x4] sm:$0xf] %v477
        %510 = vst [vmem:[%s190 + $0x8] sm:$0xf] %v478
        %511 = vst [vmem:[%s190 + $0xc] sm:$0xf] %v479
        %512 = vst [vmem:[%s190 + $0x10] sm:$0xf] %v480
        %513 = vst [vmem:[%s190 + $0x14] sm:$0xf] %v481
        %514 = vst [vmem:[%s190 + $0x18] sm:$0xf] %v482
        %515 = vst [vmem:[%s190 + $0x1c] sm:$0xf] %v483
        %516 = vst [vmem:[%s190 + $0x20] sm:$0xf] %v484
        %517 = vst [vmem:[%s190 + $0x24] sm:$0xf] %v485
        %518 = vst [vmem:[%s190 + $0x28] sm:$0xf] %v486
        %519 = vst [vmem:[%s190 + $0x2c] sm:$0xf] %v487
        %520 = vst [vmem:[%s190 + $0x30] sm:$0xf] %v488
        %521 = vst [vmem:[%s190 + $0x34] sm:$0xf] %v489
        %522 = vst [vmem:[%s190 + $0x38] sm:$0xf] %v490
        %523 = vst [vmem:[%s190 + $0x3c] sm:$0xf] %v491
      $region36: #{graph_convolution.2} parent=27 // pred_fallthru
        _
      %s524 = smul.u32 16, %s17
      %p525 = scmp.lt.s32.totalorder %s524, 47
      %s526 = scalar_select %p525, %s524, 47
      %s527 = smul.addr %s526, 4
      %s528 = scalar_lea.vmem %s2, %s527
      // Predicated region
      $region37: #{graph_convolution.2} parent=27 // pred_check
        %p529 = pneg %p97
      $region38: #{graph_convolution.2} parent=27 // pred_check_branch
        %531 = sbr.rel (%p529) target = $region40
      $region39: #{graph_convolution.2} parent=27 // pred_region
        %s532 = smul.u32 16, %s17
      $region40: #{graph_convolution.2} parent=27 // pred_fallthru
        _
    $region28: #{graph_convolution.2} parent=5 // pred_fallthru
      _
    %p533 = scmp.le.s32.totalorder 2, %s8
    // Predicated region
    $region41: #{graph_convolution.2} parent=5 // pred_check
      %p534 = pneg %p533
    $region42: #{graph_convolution.2} parent=5 // pred_check_branch
      %536 = sbr.rel (%p534) target = $region44
    $region43: #{graph_convolution.2} parent=5 // pred_region
      %s537 = ssub.s32 %s8, 2
      // Predicated region
      $region45: #{graph_convolution.2} parent=43 // pred_check
        %p538 = pneg %p103
      $region46: #{graph_convolution.2} parent=43 // pred_check_branch
        %540 = sbr.rel (%p538) target = $region48
      $region47: #{graph_convolution.2} parent=43 // pred_region
        %s541 = smul.u32 16, %s19
        %p542 = scmp.lt.s32.totalorder %s541, 47
        %s543 = scalar_select %p542, %s541, 47
        %s544 = smul.addr %s543, 4
        %s545 = scalar_lea.vmem %s2, %s544
      $region48: #{graph_convolution.2} parent=43 // pred_fallthru
        _
    $region44: #{graph_convolution.2} parent=5 // pred_fallthru
      _
  $region6: #{graph_convolution.2} parent=0 // loop_footer
    %s12 = sadd.s32 1, %s8
  $region7: #{graph_convolution.2} parent=0 // loop_footer_branch
    %7 = sbr.rel target = $region3
  $region8: #{graph_convolution.2} parent=0 // loop_exit
    _

// kernel: graph_convolution.3
$region0: #{graph_convolution.3}
  #allocation0 [shape = 'u32[]', space=smem, size = 0x4, offset = 0x4, fixed_abs, tag = 'smem constant byte address 0x4 - core index']
  #allocation1 [shape = 'u32[144,128]{1,0:T(1,128)}', space=vmem, size = 0x12000, scoped, tag = 'internal scratch']
  #allocation2 [shape = 's32[1]{0}', space=sflag, size = 0x4, scoped, tag = 'scoped memory for graph_convolution.3']
  #allocation3 [shape = 'u8[512]{0}', space=smem, size = 0x200, scoped, tag = 'prefetched SMEM operand 0']
  #allocation4 [shape = 'u8[512]{0}', space=smem, size = 0x200, scoped, tag = 'prefetched SMEM operand 1']
  %s0 = inlined_call_operand.vmem [shape: s32[2], index: 0, kind: input, shape index: {}]
  %s1 = inlined_call_operand.vmem [shape: s32[2], index: 1, kind: input, shape index: {}]
  %s2 = inlined_call_operand.vmem [shape: f32[384,384], index: 2, kind: input, shape index: {}]
  %s3 = inlined_call_operand.vmem [shape: bf16[384,128], index: 3, kind: input, shape index: {}]
  %s4 = inlined_call_operand.vmem [shape: f32[1,128], index: 4, kind: input, shape index: {}]
  %s5 = inlined_call_operand.vmem [shape: f32[384,128], index: 5, kind: output, shape index: {}]
  %s6 = sld [smem:[#allocation0]]
  $region53: #{graph_convolution.3} parent=0
    _
  %s8 = ssub.s32 1, %s6
  %s9 = scalar_select 0, %s8, %s6
  %s10 = sshll.u32 %s0, 4
  %s11 = int_to_ptr.vmem [resolvable:$true] %s10
  %13 = dma.vmem_to_smem %s11, 16, [#allocation3], [#allocation2]
  %s14 = sshll.u32 %s1, 4
  %s15 = int_to_ptr.vmem [resolvable:$true] %s14
  %17 = dma.vmem_to_smem %s15, 16, [#allocation4], [#allocation2]
  %18 = dma.done [#allocation2], 32
  %19 = sfence
  loop: start=0, step=1, limit=4
  $region2: #{graph_convolution.3} parent=0 // loop_pre_header
    _
  $region3: #{graph_convolution.3} parent=0 // loop_header
    %s21 = sphi 0, %s25
    %p22 = scmp.ge.s32.totalorder %s21, 4
    %s28 = sphi 0, %s40
    %s29 = sphi 0, %s36
    %s30 = sphi 0, %s28
    %s31 = sphi 0, %s29
    %s32 = sphi 0, %s30
    %s33 = sphi 0, %s31
    %s49 = sphi 0, %s51
    %s52 = sphi 0, %s49
    %s53 = sphi 0, %s52
    %s69 = sphi 0, %s53
    %s73 = sphi 0, %s73
    %s75 = sphi 0, %s73
    %s76 = sphi 0, %s75
    %s90 = sphi 0, %s76
    %s94 = sphi 0, %s94
    %s96 = sphi 0, %s94
    %s97 = sphi 0, %s96
    %s111 = sphi 0, %s97
    %s117 = sphi 0, %s119
    %s120 = sphi 0, %s117
    %s121 = sphi 0, %s120
    %s137 = sphi 0, %s121
  $region4: #{graph_convolution.3} parent=0 // loop_header_branch
    %24 = sbr.rel (%p22) target = $region8
  $region5: #{graph_convolution.3} parent=0 // loop_body
    %s26 = ssub.s32 %s21, 1
    %s27 = ssub.s32 %s21, 2
    %s34 = sadd.s32 1, %s29
    %p35 = scmp.ge.s32.totalorder %s34, 1
    %s36 = scalar_select %p35, 0, %s34
    %s37 = sadd.s32 1, %s28
    %s38 = scalar_select %p35, %s37, %s28
    %p39 = scmp.ge.s32.totalorder %s38, 2
    %s40 = scalar_select %p39, 0, %s38
    %s41 = sadd.s32 %s28, %s29
    %s42 = sld [smem:[#allocation3 + %s41]]
    %s43 = sadd.s32 %s40, %s36
    %s44 = sld [smem:[#allocation3 + %s43]]
    %s45 = ssub.s32 %s28, %s40
    %s46 = ssub.s32 %s42, %s44
    %s47 = sor.u32 %s45, %s46
    %p48 = scmp.eq.s32.totalorder %s47, 0
    %s50 = sadd.s32 %s49, 1
    %s51 = scalar_select %p48, %s49, %s50
    %p54 = pneg %p48
    %p55 = scmp.eq.s32.totalorder %s21, 1
    %p56 = por %p54, %p55
    %p57 = scmp.ne.s32.totalorder %s49, %s52
    %p58 = scmp.eq.s32.totalorder %s21, 0
    %p59 = por %p57, %p58
    %p60 = scmp.ne.s32.totalorder %s49, %s52
    %p61 = scmp.eq.s32.totalorder %s26, 1
    %p62 = por %p60, %p61
    %p63 = scmp.ne.s32.totalorder %s52, %s53
    %p64 = scmp.eq.s32.totalorder %s26, 0
    %p65 = por %p63, %p64
    %p66 = scmp.ne.s32.totalorder %s52, %s53
    %p67 = scmp.eq.s32.totalorder %s27, 1
    %p68 = por %p66, %p67
    %p70 = scmp.ne.s32.totalorder %s53, %s69
    %p71 = scmp.eq.s32.totalorder %s27, 0
    %p72 = por %p70, %p71
    %s74 = sadd.s32 %s73, 1
    %p77 = scmp.eq.s32.totalorder %s21, 1
    %p78 = scmp.ne.s32.totalorder %s73, %s75
    %p79 = scmp.eq.s32.totalorder %s21, 0
    %p80 = por %p78, %p79
    %p81 = scmp.ne.s32.totalorder %s73, %s75
    %p82 = scmp.eq.s32.totalorder %s26, 1
    %p83 = por %p81, %p82
    %p84 = scmp.ne.s32.totalorder %s75, %s76
    %p85 = scmp.eq.s32.totalorder %s26, 0
    %p86 = por %p84, %p85
    %p87 = scmp.ne.s32.totalorder %s75, %s76
    %p88 = scmp.eq.s32.totalorder %s27, 1
    %p89 = por %p87, %p88
    %p91 = scmp.ne.s32.totalorder %s76, %s90
    %p92 = scmp.eq.s32.totalorder %s27, 0
    %p93 = por %p91, %p92
    %s95 = sadd.s32 %s94, 1
    %p98 = scmp.eq.s32.totalorder %s21, 1
    %p99 = scmp.ne.s32.totalorder %s94, %s96
    %p100 = scmp.eq.s32.totalorder %s21, 0
    %p101 = por %p99, %p100
    %p102 = scmp.ne.s32.totalorder %s94, %s96
    %p103 = scmp.eq.s32.totalorder %s26, 1
    %p104 = por %p102, %p103
    %p105 = scmp.ne.s32.totalorder %s96, %s97
    %p106 = scmp.eq.s32.totalorder %s26, 0
    %p107 = por %p105, %p106
    %p108 = scmp.ne.s32.totalorder %s96, %s97
    %p109 = scmp.eq.s32.totalorder %s27, 1
    %p110 = por %p108, %p109
    %p112 = scmp.ne.s32.totalorder %s97, %s111
    %p113 = scmp.eq.s32.totalorder %s27, 0
    %p114 = por %p112, %p113
    %s115 = ssub.s32 %s28, %s40
    %p116 = scmp.eq.s32.totalorder %s115, 0
    %s118 = sadd.s32 %s117, 1
    %s119 = scalar_select %p116, %s117, %s118
    %p122 = pneg %p116
    %p123 = scmp.eq.s32.totalorder %s21, 1
    %p124 = por %p122, %p123
    %p125 = scmp.ne.s32.totalorder %s117, %s120
    %p126 = scmp.eq.s32.totalorder %s21, 0
    %p127 = por %p125, %p126
    %p128 = scmp.ne.s32.totalorder %s117, %s120
    %p129 = scmp.eq.s32.totalorder %s26, 1
    %p130 = por %p128, %p129
    %p131 = scmp.ne.s32.totalorder %s120, %s121
    %p132 = scmp.eq.s32.totalorder %s26, 0
    %p133 = por %p131, %p132
    %p134 = scmp.ne.s32.totalorder %s120, %s121
    %p135 = scmp.eq.s32.totalorder %s27, 1
    %p136 = por %p134, %p135
    %p138 = scmp.ne.s32.totalorder %s121, %s137
    %p139 = scmp.eq.s32.totalorder %s27, 0
    %p140 = por %p138, %p139
    %p141 = scmp.le.s32.totalorder 1, %s21
    %p142 = scmp.lt.s32.totalorder %s21, 3
    %p143 = pnand %p141, %p142
    %p144 = pneg %p143
    // Predicated region
    $region9: #{graph_convolution.3} parent=5 // pred_check
      _
    $region10: #{graph_convolution.3} parent=5 // pred_check_branch
      %146 = sbr.rel (%p143) target = $region12
    $region11: #{graph_convolution.3} parent=5 // pred_region
      %s147 = ssub.s32 %s21, 1
      // Predicated region
      $region13: #{graph_convolution.3} parent=11 // pred_check
        %p148 = pneg %p86
      $region14: #{graph_convolution.3} parent=11 // pred_check_branch
        %150 = sbr.rel (%p148) target = $region16
      $region15: #{graph_convolution.3} parent=11 // pred_region
        _
      $region16: #{graph_convolution.3} parent=11 // pred_fallthru
        _
      // Predicated region
      $region17: #{graph_convolution.3} parent=11 // pred_check
        %p151 = pneg %p107
      $region18: #{graph_convolution.3} parent=11 // pred_check_branch
        %153 = sbr.rel (%p151) target = $region20
      $region19: #{graph_convolution.3} parent=11 // pred_region
        _
      $region20: #{graph_convolution.3} parent=11 // pred_fallthru
        _
    $region12: #{graph_convolution.3} parent=5 // pred_fallthru
      _
    %p154 = scmp.lt.s32.totalorder %s21, 2
    // Predicated region
    $region21: #{graph_convolution.3} parent=5 // pred_check
      %p155 = pneg %p154
    $region22: #{graph_convolution.3} parent=5 // pred_check_branch
      %157 = sbr.rel (%p155) target = $region24
    $region23: #{graph_convolution.3} parent=5 // pred_region
      // Predicated region
      $region25: #{graph_convolution.3} parent=23 // pred_check
        %p158 = pneg %p59
      $region26: #{graph_convolution.3} parent=23 // pred_check_branch
        %160 = sbr.rel (%p158) target = $region28
      $region27: #{graph_convolution.3} parent=23 // pred_region
        %s161 = sadd.s32 %s28, %s29
        %s162 = sld [smem:[#allocation3 + %s161]]
        %s163 = smul.u32 24, %s28
        %s164 = smul.u32 3, %s162
        %p165 = scmp.lt.s32.totalorder %s163, 47
        %s166 = scalar_select %p165, %s163, 47
        %p167 = scmp.lt.s32.totalorder %s164, 2
        %s168 = scalar_select %p167, %s164, 2
        %s169 = smul.addr %s166, 3
        %s170 = sadd.s32 %s168, %s169
        %s171 = smul.addr %s170, 8
        %s172 = scalar_lea.vmem %s2, %s171
        %s173 = sadd.s32 %s28, %s29
        %s174 = sld [smem:[#allocation3 + %s173]]
        %s175 = smul.u32 24, %s28
        %s176 = smul.u32 3, %s174
      $region28: #{graph_convolution.3} parent=23 // pred_fallthru
        _
    $region24: #{graph_convolution.3} parent=5 // pred_fallthru
      _
    %p177 = scmp.le.s32.totalorder 1, %s21
    %p178 = scmp.lt.s32.totalorder %s21, 3
    %p179 = pnand %p177, %p178
    %p180 = pneg %p179
    // Predicated region
    $region29: #{graph_convolution.3} parent=5 // pred_check
      _
    $region30: #{graph_convolution.3} parent=5 // pred_check_branch
      %182 = sbr.rel (%p179) target = $region32
    $region31: #{graph_convolution.3} parent=5 // pred_region
      %s183 = ssub.s32 %s21, 1
      %s184 = sadd.s32 %s30, %s31
      %s185 = sld [smem:[#allocation3 + %s184]]
      %s186 = smul.u32 24, %s30
      %s187 = smul.u32 3, %s185
      %p188 = scmp.lt.s32.totalorder %s186, 47
      %s189 = scalar_select %p188, %s186, 47
      %p190 = scmp.lt.s32.totalorder %s187, 2
      %s191 = scalar_select %p190, %s187, 2
      %s192 = smul.addr %s189, 3
      %s193 = sadd.s32 %s191, %s192
      %s194 = smul.addr %s193, 8
      %s195 = scalar_lea.vmem %s2, %s194
      %p196 = pneg %p65
      %p197 = pneg %p62
      %p198 = pneg %p86
      %p199 = pneg %p83
      %p200 = pneg %p107
      %p201 = pneg %p104
      %p202 = pneg %p133
      %p203 = pneg %p130
      %s204 = smul.u32 24, %s30
      %p205 = scmp.lt.s32.totalorder %s204, 47
      %s206 = scalar_select %p205, %s204, 47
      %s207 = smul.addr %s206, 8
      %s208 = scalar_lea.vmem %s5, %s207
      %s209 = sadd.s32 %s30, %s31
      %s210 = sld [smem:[#allocation3 + %s209]]
      %s211 = smul.u32 24, %s30
      %s212 = smul.u32 3, %s210
      %p213 = scmp.lt.s32.totalorder %s211, 47
      %s214 = scalar_select %p213, %s211, 47
      %p215 = scmp.lt.s32.totalorder %s212, 2
      %s216 = scalar_select %p215, %s212, 2
      %s217 = smul.addr %s214, 3
      %s218 = sadd.s32 %s216, %s217
      %s219 = smul.addr %s218, 8
      %s220 = scalar_lea.vmem %s2, %s219
      %s221 = sadd.s32 %s30, %s31
      %s222 = sld [smem:[#allocation3 + %s221]]
      %s223 = smul.u32 24, %s30
      %s224 = smul.u32 3, %s222
      %s225 = smul.u32 24, %s30
      %p226 = scmp.lt.s32.totalorder %s225, 47
      %s227 = scalar_select %p226, %s225, 47
      %s228 = smul.addr %s227, 8
      %s229 = scalar_lea.vmem %s5, %s228
      %s230 = smul.u32 24, %s30
      %p232 = scmp.eq.s32.totalorder %s31, 0
      // Predicated region
      $region33: #{graph_convolution.3} parent=31 // pred_check
        %p233 = pneg %p232
      $region34: #{graph_convolution.3} parent=31 // pred_check_branch
        %235 = sbr.rel (%p233) target = $region36
      $region35: #{graph_convolution.3} parent=31 // pred_region
        %v236 = vld [vmem:[%s4] sm:$0x1]
        %v238 = vlaneseq
        %v239 = vshrl.u32 %v238, 7
        %v240 = vsub.s32 0, %v239
        %v241 = vrot.slane %v236, %v240
        %243 = vst [vmem:[%s229] sm:$0xff] %v241
        %244 = vst [vmem:[%s229 + $0x8] sm:$0xff] %v241
        %245 = vst [vmem:[%s229 + $0x10] sm:$0xff] %v241
        %246 = vst [vmem:[%s229 + $0x18] sm:$0xff] %v241
        %247 = vst [vmem:[%s229 + $0x20] sm:$0xff] %v241
        %248 = vst [vmem:[%s229 + $0x28] sm:$0xff] %v241
        %249 = vst [vmem:[%s229 + $0x30] sm:$0xff] %v241
        %250 = vst [vmem:[%s229 + $0x38] sm:$0xff] %v241
        %251 = vst [vmem:[%s229 + $0x40] sm:$0xff] %v241
        %252 = vst [vmem:[%s229 + $0x48] sm:$0xff] %v241
        %253 = vst [vmem:[%s229 + $0x50] sm:$0xff] %v241
        %254 = vst [vmem:[%s229 + $0x58] sm:$0xff] %v241
        %255 = vst [vmem:[%s229 + $0x60] sm:$0xff] %v241
        %256 = vst [vmem:[%s229 + $0x68] sm:$0xff] %v241
        %257 = vst [vmem:[%s229 + $0x70] sm:$0xff] %v241
        %258 = vst [vmem:[%s229 + $0x78] sm:$0xff] %v241
        %259 = vst [vmem:[%s229 + $0x80] sm:$0xff] %v241
        %260 = vst [vmem:[%s229 + $0x88] sm:$0xff] %v241
        %261 = vst [vmem:[%s229 + $0x90] sm:$0xff] %v241
        %262 = vst [vmem:[%s229 + $0x98] sm:$0xff] %v241
        %263 = vst [vmem:[%s229 + $0xa0] sm:$0xff] %v241
        %264 = vst [vmem:[%s229 + $0xa8] sm:$0xff] %v241
        %265 = vst [vmem:[%s229 + $0xb0] sm:$0xff] %v241
        %266 = vst [vmem:[%s229 + $0xb8] sm:$0xff] %v241
      $region36: #{graph_convolution.3} parent=31 // pred_fallthru
        _
      %s267 = sld [smem:[#allocation4 + %s30]]
      %p268 = scmp.lt.s32.totalorder %s31, %s267
      // Predicated region
      $region37: #{graph_convolution.3} parent=31 // pred_check
        %p269 = pneg %p268
      $region38: #{graph_convolution.3} parent=31 // pred_check_branch
        %271 = sbr.rel (%p269) target = $region40
      $region39: #{graph_convolution.3} parent=31 // pred_region
        %v272 = vld [vmem:[%s220] sm:$0xff]
        %v273 = vld [vmem:[%s220 + $0x8] sm:$0xff]
        %v274 = vld [vmem:[%s220 + $0x10] sm:$0xff]
        %v275 = vld [vmem:[%s220 + $0x18] sm:$0xff]
        %v276 = vld [vmem:[%s220 + $0x20] sm:$0xff]
        %v277 = vld [vmem:[%s220 + $0x28] sm:$0xff]
        %v278 = vld [vmem:[%s220 + $0x30] sm:$0xff]
        %v279 = vld [vmem:[%s220 + $0x38] sm:$0xff]
        %v280 = vld [vmem:[%s220 + $0x40] sm:$0xff]
        %v281 = vld [vmem:[%s220 + $0x48] sm:$0xff]
        %v282 = vld [vmem:[%s220 + $0x50] sm:$0xff]
        %v283 = vld [vmem:[%s220 + $0x58] sm:$0xff]
        %v284 = vld [vmem:[%s220 + $0x60] sm:$0xff]
        %v285 = vld [vmem:[%s220 + $0x68] sm:$0xff]
        %v286 = vld [vmem:[%s220 + $0x70] sm:$0xff]
        %v287 = vld [vmem:[%s220 + $0x78] sm:$0xff]
        %v288 = vld [vmem:[%s220 + $0x80] sm:$0xff]
        %v289 = vld [vmem:[%s220 + $0x88] sm:$0xff]
        %v290 = vld [vmem:[%s220 + $0x90] sm:$0xff]
        %v291 = vld [vmem:[%s220 + $0x98] sm:$0xff]
        %v292 = vld [vmem:[%s220 + $0xa0] sm:$0xff]
        %v293 = vld [vmem:[%s220 + $0xa8] sm:$0xff]
        %v294 = vld [vmem:[%s220 + $0xb0] sm:$0xff]
        %v295 = vld [vmem:[%s220 + $0xb8] sm:$0xff]
        %v296 = vld [vmem:[%s220 + $0xc0] sm:$0xff]
        %v297 = vld [vmem:[%s220 + $0xc8] sm:$0xff]
        %v298 = vld [vmem:[%s220 + $0xd0] sm:$0xff]
        %v299 = vld [vmem:[%s220 + $0xd8] sm:$0xff]
        %v300 = vld [vmem:[%s220 + $0xe0] sm:$0xff]
        %v301 = vld [vmem:[%s220 + $0xe8] sm:$0xff]
        %v302 = vld [vmem:[%s220 + $0xf0] sm:$0xff]
        %v303 = vld [vmem:[%s220 + $0xf8] sm:$0xff]
        %v304 = vld [vmem:[%s220 + $0x100] sm:$0xff]
        %v305 = vld [vmem:[%s220 + $0x108] sm:$0xff]
        %v306 = vld [vmem:[%s220 + $0x110] sm:$0xff]
        %v307 = vld [vmem:[%s220 + $0x118] sm:$0xff]
        %v308 = vld [vmem:[%s220 + $0x120] sm:$0xff]
        %v309 = vld [vmem:[%s220 + $0x128] sm:$0xff]
        %v310 = vld [vmem:[%s220 + $0x130] sm:$0xff]
        %v311 = vld [vmem:[%s220 + $0x138] sm:$0xff]
        %v312 = vld [vmem:[%s220 + $0x140] sm:$0xff]
        %v313 = vld [vmem:[%s220 + $0x148] sm:$0xff]
        %v314 = vld [vmem:[%s220 + $0x150] sm:$0xff]
        %v315 = vld [vmem:[%s220 + $0x158] sm:$0xff]
        %v316 = vld [vmem:[%s220 + $0x160] sm:$0xff]
        %v317 = vld [vmem:[%s220 + $0x168] sm:$0xff]
        %v318 = vld [vmem:[%s220 + $0x170] sm:$0xff]
        %v319 = vld [vmem:[%s220 + $0x178] sm:$0xff]
        %v320 = vld [vmem:[%s220 + $0x180] sm:$0xff]
        %v321 = vld [vmem:[%s220 + $0x188] sm:$0xff]
        %v322 = vld [vmem:[%s220 + $0x190] sm:$0xff]
        %v323 = vld [vmem:[%s220 + $0x198] sm:$0xff]
        %v324 = vld [vmem:[%s220 + $0x1a0] sm:$0xff]
        %v325 = vld [vmem:[%s220 + $0x1a8] sm:$0xff]
        %v326 = vld [vmem:[%s220 + $0x1b0] sm:$0xff]
        %v327 = vld [vmem:[%s220 + $0x1b8] sm:$0xff]
        %v328 = vld [vmem:[%s220 + $0x1c0] sm:$0xff]
        %v329 = vld [vmem:[%s220 + $0x1c8] sm:$0xff]
        %v330 = vld [vmem:[%s220 + $0x1d0] sm:$0xff]
        %v331 = vld [vmem:[%s220 + $0x1d8] sm:$0xff]
        %v332 = vld [vmem:[%s220 + $0x1e0] sm:$0xff]
        %v333 = vld [vmem:[%s220 + $0x1e8] sm:$0xff]
        %v334 = vld [vmem:[%s220 + $0x1f0] sm:$0xff]
        %v335 = vld [vmem:[%s220 + $0x1f8] sm:$0xff]
        %v336 = vld [vmem:[%s220 + $0x200] sm:$0xff]
        %v337 = vld [vmem:[%s220 + $0x208] sm:$0xff]
        %v338 = vld [vmem:[%s220 + $0x210] sm:$0xff]
        %v339 = vld [vmem:[%s220 + $0x218] sm:$0xff]
        %v340 = vld [vmem:[%s220 + $0x220] sm:$0xff]
        %v341 = vld [vmem:[%s220 + $0x228] sm:$0xff]
        %v342 = vld [vmem:[%s220 + $0x230] sm:$0xff]
        %v343 = vld [vmem:[%s220 + $0x238] sm:$0xff]
        %v344 = vpack.c.bf16 %v275, %v272
        %v345 = vpack.c.bf16 %v276, %v273
        %v346 = vpack.c.bf16 %v277, %v274
        %v347 = vpack.c.bf16 %v281, %v278
        %v348 = vpack.c.bf16 %v282, %v279
        %v349 = vpack.c.bf16 %v283, %v280
        %v350 = vpack.c.bf16 %v287, %v284
        %v351 = vpack.c.bf16 %v288, %v285
        %v352 = vpack.c.bf16 %v289, %v286
        %v353 = vpack.c.bf16 %v293, %v290
        %v354 = vpack.c.bf16 %v294, %v291
        %v355 = vpack.c.bf16 %v295, %v292
        %v356 = vpack.c.bf16 %v299, %v296
        %v357 = vpack.c.bf16 %v300, %v297
        %v358 = vpack.c.bf16 %v301, %v298
        %v359 = vpack.c.bf16 %v305, %v302
        %v360 = vpack.c.bf16 %v306, %v303
        %v361 = vpack.c.bf16 %v307, %v304
        %v362 = vpack.c.bf16 %v311, %v308
        %v363 = vpack.c.bf16 %v312, %v309
        %v364 = vpack.c.bf16 %v313, %v310
        %v365 = vpack.c.bf16 %v317, %v314
        %v366 = vpack.c.bf16 %v318, %v315
        %v367 = vpack.c.bf16 %v319, %v316
        %v368 = vpack.c.bf16 %v323, %v320
        %v369 = vpack.c.bf16 %v324, %v321
        %v370 = vpack.c.bf16 %v325, %v322
        %v371 = vpack.c.bf16 %v329, %v326
        %v372 = vpack.c.bf16 %v330, %v327
        %v373 = vpack.c.bf16 %v331, %v328
        %v374 = vpack.c.bf16 %v335, %v332
        %v375 = vpack.c.bf16 %v336, %v333
        %v376 = vpack.c.bf16 %v337, %v334
        %v377 = vpack.c.bf16 %v341, %v338
        %v378 = vpack.c.bf16 %v342, %v339
        %v379 = vpack.c.bf16 %v343, %v340
        %s380 = sadd.s32 %s30, %s31
        %s381 = sld [smem:[#allocation3 + %s380]]
        %s382 = smul.u32 %s381, 384
        %s383 = sshra.s32 %s382, 3
        %s384 = sand.u32 %s382, 7
        %s385 = smul.addr %s383, 4
        %s386 = scalar_lea.vmem %s3, %s385
        %v387 = vld [vmem:[%s386] sm:$0xf]
        %v388 = vld [vmem:[%s386 + $0x4] sm:$0xf]
        %v389 = vld [vmem:[%s386 + $0x8] sm:$0xf]
        %v390 = vld [vmem:[%s386 + $0xc] sm:$0xf]
        %v391 = vld [vmem:[%s386 + $0x10] sm:$0xf]
        %v392 = vld [vmem:[%s386 + $0x14] sm:$0xf]
        %v393 = vld [vmem:[%s386 + $0x18] sm:$0xf]
        %v394 = vld [vmem:[%s386 + $0x1c] sm:$0xf]
        %v395 = vld [vmem:[%s386 + $0x20] sm:$0xf]
        %v396 = vld [vmem:[%s386 + $0x24] sm:$0xf]
        %v397 = vld [vmem:[%s386 + $0x28] sm:$0xf]
        %v398 = vld [vmem:[%s386 + $0x2c] sm:$0xf]
        %v399 = vld [vmem:[%s386 + $0x30] sm:$0xf]
        %v400 = vld [vmem:[%s386 + $0x34] sm:$0xf]
        %v401 = vld [vmem:[%s386 + $0x38] sm:$0xf]
        %v402 = vld [vmem:[%s386 + $0x3c] sm:$0xf]
        %v403 = vld [vmem:[%s386 + $0x40] sm:$0xf]
        %v404 = vld [vmem:[%s386 + $0x44] sm:$0xf]
        %v405 = vld [vmem:[%s386 + $0x48] sm:$0xf]
        %v406 = vld [vmem:[%s386 + $0x4c] sm:$0xf]
        %v407 = vld [vmem:[%s386 + $0x50] sm:$0xf]
        %v408 = vld [vmem:[%s386 + $0x54] sm:$0xf]
        %v409 = vld [vmem:[%s386 + $0x58] sm:$0xf]
        %v410 = vld [vmem:[%s386 + $0x5c] sm:$0xf]
        %v411 = vld [vmem:[%s386 + $0x60] sm:$0xf]
        %v412 = vld [vmem:[%s386 + $0x64] sm:$0xf]
        %v413 = vld [vmem:[%s386 + $0x68] sm:$0xf]
        %v414 = vld [vmem:[%s386 + $0x6c] sm:$0xf]
        %v415 = vld [vmem:[%s386 + $0x70] sm:$0xf]
        %v416 = vld [vmem:[%s386 + $0x74] sm:$0xf]
        %v417 = vld [vmem:[%s386 + $0x78] sm:$0xf]
        %v418 = vld [vmem:[%s386 + $0x7c] sm:$0xf]
        %v419 = vld [vmem:[%s386 + $0x80] sm:$0xf]
        %v420 = vld [vmem:[%s386 + $0x84] sm:$0xf]
        %v421 = vld [vmem:[%s386 + $0x88] sm:$0xf]
        %v422 = vld [vmem:[%s386 + $0x8c] sm:$0xf]
        %v423 = vld [vmem:[%s386 + $0x90] sm:$0xf]
        %v424 = vld [vmem:[%s386 + $0x94] sm:$0xf]
        %v425 = vld [vmem:[%s386 + $0x98] sm:$0xf]
        %v426 = vld [vmem:[%s386 + $0x9c] sm:$0xf]
        %v427 = vld [vmem:[%s386 + $0xa0] sm:$0xf]
        %v428 = vld [vmem:[%s386 + $0xa4] sm:$0xf]
        %v429 = vld [vmem:[%s386 + $0xa8] sm:$0xf]
        %v430 = vld [vmem:[%s386 + $0xac] sm:$0xf]
        %v431 = vld [vmem:[%s386 + $0xb0] sm:$0xf]
        %v432 = vld [vmem:[%s386 + $0xb4] sm:$0xf]
        %v433 = vld [vmem:[%s386 + $0xb8] sm:$0xf]
        %v434 = vld [vmem:[%s386 + $0xbc] sm:$0xf]
        %v435 = vld [vmem:[%s229] sm:$0xff]
        %v436 = vld [vmem:[%s229 + $0x8] sm:$0xff]
        %v437 = vld [vmem:[%s229 + $0x10] sm:$0xff]
        %v438 = vld [vmem:[%s229 + $0x18] sm:$0xff]
        %v439 = vld [vmem:[%s229 + $0x20] sm:$0xff]
        %v440 = vld [vmem:[%s229 + $0x28] sm:$0xff]
        %v441 = vld [vmem:[%s229 + $0x30] sm:$0xff]
        %v442 = vld [vmem:[%s229 + $0x38] sm:$0xff]
        %v443 = vld [vmem:[%s229 + $0x40] sm:$0xff]
        %v444 = vld [vmem:[%s229 + $0x48] sm:$0xff]
        %v445 = vld [vmem:[%s229 + $0x50] sm:$0xff]
        %v446 = vld [vmem:[%s229 + $0x58] sm:$0xff]
        %v447 = vld [vmem:[%s229 + $0x60] sm:$0xff]
        %v448 = vld [vmem:[%s229 + $0x68] sm:$0xff]
        %v449 = vld [vmem:[%s229 + $0x70] sm:$0xff]
        %v450 = vld [vmem:[%s229 + $0x78] sm:$0xff]
        %v451 = vld [vmem:[%s229 + $0x80] sm:$0xff]
        %v452 = vld [vmem:[%s229 + $0x88] sm:$0xff]
        %v453 = vld [vmem:[%s229 + $0x90] sm:$0xff]
        %v454 = vld [vmem:[%s229 + $0x98] sm:$0xff]
        %v455 = vld [vmem:[%s229 + $0xa0] sm:$0xff]
        %v456 = vld [vmem:[%s229 + $0xa8] sm:$0xff]
        %v457 = vld [vmem:[%s229 + $0xb0] sm:$0xff]
        %v458 = vld [vmem:[%s229 + $0xb8] sm:$0xff]
        %v507 = vunpack.c.l.b16 %v387
        %v508 = vunpack.c.l.b16 %v388
        %v509 = vunpack.c.l.b16 %v389
        %v510 = vunpack.c.l.b16 %v390
        %v511 = vunpack.c.l.b16 %v391
        %v512 = vunpack.c.l.b16 %v392
        %v513 = vunpack.c.l.b16 %v393
        %v514 = vunpack.c.l.b16 %v394
        %v515 = vunpack.c.l.b16 %v395
        %v516 = vunpack.c.l.b16 %v396
        %v517 = vunpack.c.l.b16 %v397
        %v518 = vunpack.c.l.b16 %v398
        %v519 = vunpack.c.l.b16 %v399
        %v520 = vunpack.c.l.b16 %v400
        %v521 = vunpack.c.l.b16 %v401
        %v522 = vunpack.c.l.b16 %v402
        %v523 = vunpack.c.l.b16 %v403
        %v524 = vunpack.c.l.b16 %v404
        %v525 = vunpack.c.l.b16 %v405
        %v526 = vunpack.c.l.b16 %v406
        %v527 = vunpack.c.l.b16 %v407
        %v528 = vunpack.c.l.b16 %v408
        %v529 = vunpack.c.l.b16 %v409
        %v530 = vunpack.c.l.b16 %v410
        %v531 = vunpack.c.l.b16 %v411
        %v532 = vunpack.c.l.b16 %v412
        %v533 = vunpack.c.l.b16 %v413
        %v534 = vunpack.c.l.b16 %v414
        %v535 = vunpack.c.l.b16 %v415
        %v536 = vunpack.c.l.b16 %v416
        %v537 = vunpack.c.l.b16 %v417
        %v538 = vunpack.c.l.b16 %v418
        %v539 = vunpack.c.l.b16 %v419
        %v540 = vunpack.c.l.b16 %v420
        %v541 = vunpack.c.l.b16 %v421
        %v542 = vunpack.c.l.b16 %v422
        %v543 = vunpack.c.l.b16 %v423
        %v544 = vunpack.c.l.b16 %v424
        %v545 = vunpack.c.l.b16 %v425
        %v546 = vunpack.c.l.b16 %v426
        %v547 = vunpack.c.l.b16 %v427
        %v548 = vunpack.c.l.b16 %v428
        %v549 = vunpack.c.l.b16 %v429
        %v550 = vunpack.c.l.b16 %v430
        %v551 = vunpack.c.l.b16 %v431
        %v552 = vunpack.c.l.b16 %v432
        %v553 = vunpack.c.l.b16 %v433
        %v554 = vunpack.c.l.b16 %v434
        %v555 = vpack.c.b16 %v508, %v507
        %v556 = vpack.c.b16 %v510, %v509
        %v557 = vpack.c.b16 %v512, %v511
        %v558 = vpack.c.b16 %v514, %v513
        %v559 = vpack.c.b16 %v516, %v515
        %v560 = vpack.c.b16 %v518, %v517
        %v561 = vpack.c.b16 %v520, %v519
        %v562 = vpack.c.b16 %v522, %v521
        %v563 = vpack.c.b16 %v524, %v523
        %v564 = vpack.c.b16 %v526, %v525
        %v565 = vpack.c.b16 %v528, %v527
        %v566 = vpack.c.b16 %v530, %v529
        %v567 = vpack.c.b16 %v532, %v531
        %v568 = vpack.c.b16 %v534, %v533
        %v569 = vpack.c.b16 %v536, %v535
        %v570 = vpack.c.b16 %v538, %v537
        %v571 = vpack.c.b16 %v540, %v539
        %v572 = vpack.c.b16 %v542, %v541
        %v573 = vpack.c.b16 %v544, %v543
        %v574 = vpack.c.b16 %v546, %v545
        %v575 = vpack.c.b16 %v548, %v547
        %v576 = vpack.c.b16 %v550, %v549
        %v577 = vpack.c.b16 %v552, %v551
        %v578 = vpack.c.b16 %v554, %v553
        %603 = vmatprep.subr.bf16.mxu0 0
        %604 = vmatpush1.bf16.msra.mxu0 %v555
        %605 = vmatprep.subr.bf16.mxu0 0
        %606 = vmatpush1.bf16.msra.mxu0 %v556
        %607 = vmatprep.subr.bf16.mxu0 0
        %608 = vmatpush1.bf16.msra.mxu0 %v557
        %609 = vmatprep.subr.bf16.mxu0 0
        %610 = vmatpush1.bf16.msra.mxu0 %v558
        %611 = vmatprep.subr.bf16.mxu0 0
        %612 = vmatpush1.bf16.msra.mxu0 %v559
        %613 = vmatprep.subr.bf16.mxu0 0
        %614 = vmatpush1.bf16.msra.mxu0 %v560
        %615 = vmatprep.subr.bf16.mxu0 0
        %616 = vmatpush1.bf16.msra.mxu0 %v561
        %617 = vmatprep.subr.bf16.mxu0 0
        %618 = vmatpush1.bf16.msra.mxu0 %v562
        %619 = vmatprep.subr.bf16.mxu0 0
        %620 = vmatpush1.bf16.msra.mxu0 %v563
        %621 = vmatprep.subr.bf16.mxu0 0
        %622 = vmatpush1.bf16.msra.mxu0 %v564
        %623 = vmatprep.subr.bf16.mxu0 0
        %624 = vmatpush1.bf16.msra.mxu0 %v565
        %625 = vmatprep.subr.bf16.mxu0 0
        %626 = vmatpush1.bf16.msra.mxu0 %v566
        %627 = vmatprep.subr.bf16.mxu0 0
        %628 = vmatpush1.bf16.msra.mxu0 %v567
        %629 = vmatprep.subr.bf16.mxu0 0
        %630 = vmatpush1.bf16.msra.mxu0 %v568
        %631 = vmatprep.subr.bf16.mxu0 0
        %632 = vmatpush1.bf16.msra.mxu0 %v569
        %633 = vmatprep.subr.bf16.mxu0 0
        %634 = vmatpush1.bf16.msra.mxu0 %v570
        %635 = vmatprep.mubr.bf16.mxu0 %v345
        %636 = vmatmul.mubr.bf16.gmra.mrb[0].mxu0 %v344
        %v637 = vpop.f32.mrb[0].mxu0
        %v638 = vadd.f32 0.0, %v637
        %v639 = vpop.f32.mrb[0].mxu0
        %v640 = vpop.f32.mrb[0].mxu0
        %v641 = vadd.f32 0.0, %v640
        %v642 = vpop.f32.mrb[0].mxu0
        %643 = vmatprep.mubr.bf16.mxu0 %v348
        %644 = vmatmul.mubr.bf16.gmra.mrb[0].mxu0 %v347
        %v645 = vpop.f32.mrb[0].mxu0
        %v646 = vadd.f32 0.0, %v645
        %v647 = vpop.f32.mrb[0].mxu0
        %v648 = vpop.f32.mrb[0].mxu0
        %v649 = vadd.f32 0.0, %v648
        %v650 = vpop.f32.mrb[0].mxu0
        %651 = vmatprep.mubr.bf16.mxu0 %v351
        %652 = vmatmul.mubr.bf16.gmra.mrb[0].mxu0 %v350
        %v653 = vpop.f32.mrb[0].mxu0
        %v654 = vadd.f32 0.0, %v653
        %v655 = vpop.f32.mrb[0].mxu0
        %v656 = vpop.f32.mrb[0].mxu0
        %v657 = vadd.f32 0.0, %v656
        %v658 = vpop.f32.mrb[0].mxu0
        %659 = vmatprep.mubr.bf16.mxu0 %v354
        %660 = vmatmul.mubr.bf16.gmra.mrb[0].mxu0 %v353
        %v661 = vpop.f32.mrb[0].mxu0
        %v662 = vadd.f32 0.0, %v661
        %v663 = vpop.f32.mrb[0].mxu0
        %v664 = vpop.f32.mrb[0].mxu0
        %v665 = vadd.f32 0.0, %v664
        %v666 = vpop.f32.mrb[0].mxu0
        %667 = vmatprep.mubr.bf16.mxu0 %v357
        %668 = vmatmul.mubr.bf16.gmra.mrb[0].mxu0 %v356
        %v669 = vpop.f32.mrb[0].mxu0
        %v670 = vadd.f32 0.0, %v669
        %v671 = vpop.f32.mrb[0].mxu0
        %v672 = vpop.f32.mrb[0].mxu0
        %v673 = vadd.f32 0.0, %v672
        %v674 = vpop.f32.mrb[0].mxu0
        %675 = vmatprep.mubr.bf16.mxu0 %v360
        %676 = vmatmul.mubr.bf16.gmra.mrb[0].mxu0 %v359
        %v677 = vpop.f32.mrb[0].mxu0
        %v678 = vadd.f32 0.0, %v677
        %v679 = vpop.f32.mrb[0].mxu0
        %v680 = vpop.f32.mrb[0].mxu0
        %v681 = vadd.f32 0.0, %v680
        %v682 = vpop.f32.mrb[0].mxu0
        %683 = vmatprep.mubr.bf16.mxu0 %v363
        %684 = vmatmul.mubr.bf16.gmra.mrb[0].mxu0 %v362
        %v685 = vpop.f32.mrb[0].mxu0
        %v686 = vadd.f32 0.0, %v685
        %v687 = vpop.f32.mrb[0].mxu0
        %v688 = vpop.f32.mrb[0].mxu0
        %v689 = vadd.f32 0.0, %v688
        %v690 = vpop.f32.mrb[0].mxu0
        %691 = vmatprep.mubr.bf16.mxu0 %v366
        %692 = vmatmul.mubr.bf16.gmra.mrb[0].mxu0 %v365
        %v693 = vpop.f32.mrb[0].mxu0
        %v694 = vadd.f32 0.0, %v693
        %v695 = vpop.f32.mrb[0].mxu0
        %v696 = vpop.f32.mrb[0].mxu0
        %v697 = vadd.f32 0.0, %v696
        %v698 = vpop.f32.mrb[0].mxu0
        %699 = vmatprep.mubr.bf16.mxu0 %v369
        %700 = vmatmul.mubr.bf16.gmra.mrb[0].mxu0 %v368
        %v701 = vpop.f32.mrb[0].mxu0
        %v702 = vadd.f32 0.0, %v701
        %v703 = vpop.f32.mrb[0].mxu0
        %v704 = vpop.f32.mrb[0].mxu0
        %v705 = vadd.f32 0.0, %v704
        %v706 = vpop.f32.mrb[0].mxu0
        %707 = vmatprep.mubr.bf16.mxu0 %v372
        %708 = vmatmul.mubr.bf16.gmra.mrb[0].mxu0 %v371
        %v709 = vpop.f32.mrb[0].mxu0
        %v710 = vadd.f32 0.0, %v709
        %v711 = vpop.f32.mrb[0].mxu0
        %v712 = vpop.f32.mrb[0].mxu0
        %v713 = vadd.f32 0.0, %v712
        %v714 = vpop.f32.mrb[0].mxu0
        %715 = vmatprep.mubr.bf16.mxu0 %v375
        %716 = vmatmul.mubr.bf16.gmra.mrb[0].mxu0 %v374
        %v717 = vpop.f32.mrb[0].mxu0
        %v718 = vadd.f32 0.0, %v717
        %v719 = vpop.f32.mrb[0].mxu0
        %v720 = vpop.f32.mrb[0].mxu0
        %v721 = vadd.f32 0.0, %v720
        %v722 = vpop.f32.mrb[0].mxu0
        %723 = vmatprep.mubr.bf16.mxu0 %v378
        %724 = vmatmul.mubr.bf16.gmra.mrb[0].mxu0 %v377
        %v725 = vpop.f32.mrb[0].mxu0
        %v726 = vadd.f32 0.0, %v725
        %v727 = vpop.f32.mrb[0].mxu0
        %v728 = vpop.f32.mrb[0].mxu0
        %v729 = vadd.f32 0.0, %v728
        %v730 = vpop.f32.mrb[0].mxu0
        %731 = vdwg.mxu0
        %732 = vmatprep.subr.bf16.mxu0 0
        %733 = vmatpush1.bf16.msra.mxu0 %v571
        %734 = vmatprep.subr.bf16.mxu0 0
        %735 = vmatpush1.bf16.msra.mxu0 %v572
        %736 = vmatprep.subr.bf16.mxu0 0
        %737 = vmatpush1.bf16.msra.mxu0 %v573
        %738 = vmatprep.subr.bf16.mxu0 0
        %739 = vmatpush1.bf16.msra.mxu0 %v574
        %740 = vmatprep.subr.bf16.mxu0 0
        %741 = vmatpush1.bf16.msra.mxu0 %v575
        %742 = vmatprep.subr.bf16.mxu0 0
        %743 = vmatpush1.bf16.msra.mxu0 %v576
        %744 = vmatprep.subr.bf16.mxu0 0
        %745 = vmatpush1.bf16.msra.mxu0 %v577
        %746 = vmatprep.subr.bf16.mxu0 0
        %747 = vmatpush1.bf16.msra.mxu0 %v578
        %748 = vmatprep.subr.bf16.mxu0 0
        %749 = vmatpush1.bf16.msra.mxu0 0
        %750 = vmatprep.subr.bf16.mxu0 0
        %751 = vmatpush1.bf16.msra.mxu0 0
        %752 = vmatprep.subr.bf16.mxu0 0
        %753 = vmatpush1.bf16.msra.mxu0 0
        %754 = vmatprep.subr.bf16.mxu0 0
        %755 = vmatpush1.bf16.msra.mxu0 0
        %756 = vmatprep.subr.bf16.mxu0 0
        %757 = vmatpush1.bf16.msra.mxu0 0
        %758 = vmatprep.subr.bf16.mxu0 0
        %759 = vmatpush1.bf16.msra.mxu0 0
        %760 = vmatprep.subr.bf16.mxu0 0
        %761 = vmatpush1.bf16.msra.mxu0 0
        %762 = vmatprep.subr.bf16.mxu0 0
        %763 = vmatpush1.bf16.msra.mxu0 0
        %764 = vmatprep.mubr.bf16.mxu0 0
        %765 = vmatmul.mubr.bf16.gmra.mrb[0].mxu0 %v346
        %v766 = vpop.f32.mrb[0].mxu0
        %v767 = vadd.f32 %v638, %v766
        %v768 = vpop.f32.mrb[0].mxu0
        %v769 = vpop.f32.mrb[0].mxu0
        %v770 = vadd.f32 %v641, %v769
        %v771 = vpop.f32.mrb[0].mxu0
        %772 = vmatprep.mubr.bf16.mxu0 0
        %773 = vmatmul.mubr.bf16.gmra.mrb[0].mxu0 %v349
        %v774 = vpop.f32.mrb[0].mxu0
        %v775 = vadd.f32 %v646, %v774
        %v776 = vpop.f32.mrb[0].mxu0
        %v777 = vpop.f32.mrb[0].mxu0
        %v778 = vadd.f32 %v649, %v777
        %v779 = vpop.f32.mrb[0].mxu0
        %780 = vmatprep.mubr.bf16.mxu0 0
        %781 = vmatmul.mubr.bf16.gmra.mrb[0].mxu0 %v352
        %v782 = vpop.f32.mrb[0].mxu0
        %v783 = vadd.f32 %v654, %v782
        %v784 = vpop.f32.mrb[0].mxu0
        %v785 = vpop.f32.mrb[0].mxu0
        %v786 = vadd.f32 %v657, %v785
        %v787 = vpop.f32.mrb[0].mxu0
        %788 = vmatprep.mubr.bf16.mxu0 0
        %789 = vmatmul.mubr.bf16.gmra.mrb[0].mxu0 %v355
        %v790 = vpop.f32.mrb[0].mxu0
        %v791 = vadd.f32 %v662, %v790
        %v792 = vpop.f32.mrb[0].mxu0
        %v793 = vpop.f32.mrb[0].mxu0
        %v794 = vadd.f32 %v665, %v793
        %v795 = vpop.f32.mrb[0].mxu0
        %796 = vmatprep.mubr.bf16.mxu0 0
        %797 = vmatmul.mubr.bf16.gmra.mrb[0].mxu0 %v358
        %v798 = vpop.f32.mrb[0].mxu0
        %v799 = vadd.f32 %v670, %v798
        %v800 = vpop.f32.mrb[0].mxu0
        %v801 = vpop.f32.mrb[0].mxu0
        %v802 = vadd.f32 %v673, %v801
        %v803 = vpop.f32.mrb[0].mxu0
        %804 = vmatprep.mubr.bf16.mxu0 0
        %805 = vmatmul.mubr.bf16.gmra.mrb[0].mxu0 %v361
        %v806 = vpop.f32.mrb[0].mxu0
        %v807 = vadd.f32 %v678, %v806
        %v808 = vpop.f32.mrb[0].mxu0
        %v809 = vpop.f32.mrb[0].mxu0
        %v810 = vadd.f32 %v681, %v809
        %v811 = vpop.f32.mrb[0].mxu0
        %812 = vmatprep.mubr.bf16.mxu0 0
        %813 = vmatmul.mubr.bf16.gmra.mrb[0].mxu0 %v364
        %v814 = vpop.f32.mrb[0].mxu0
        %v815 = vadd.f32 %v686, %v814
        %v816 = vpop.f32.mrb[0].mxu0
        %v817 = vpop.f32.mrb[0].mxu0
        %v818 = vadd.f32 %v689, %v817
        %v819 = vpop.f32.mrb[0].mxu0
        %820 = vmatprep.mubr.bf16.mxu0 0
        %821 = vmatmul.mubr.bf16.gmra.mrb[0].mxu0 %v367
        %v822 = vpop.f32.mrb[0].mxu0
        %v823 = vadd.f32 %v694, %v822
        %v824 = vpop.f32.mrb[0].mxu0
        %v825 = vpop.f32.mrb[0].mxu0
        %v826 = vadd.f32 %v697, %v825
        %v827 = vpop.f32.mrb[0].mxu0
        %828 = vmatprep.mubr.bf16.mxu0 0
        %829 = vmatmul.mubr.bf16.gmra.mrb[0].mxu0 %v370
        %v830 = vpop.f32.mrb[0].mxu0
        %v831 = vadd.f32 %v702, %v830
        %v832 = vpop.f32.mrb[0].mxu0
        %v833 = vpop.f32.mrb[0].mxu0
        %v834 = vadd.f32 %v705, %v833
        %v835 = vpop.f32.mrb[0].mxu0
        %836 = vmatprep.mubr.bf16.mxu0 0
        %837 = vmatmul.mubr.bf16.gmra.mrb[0].mxu0 %v373
        %v838 = vpop.f32.mrb[0].mxu0
        %v839 = vadd.f32 %v710, %v838
        %v840 = vpop.f32.mrb[0].mxu0
        %v841 = vpop.f32.mrb[0].mxu0
        %v842 = vadd.f32 %v713, %v841
        %v843 = vpop.f32.mrb[0].mxu0
        %844 = vmatprep.mubr.bf16.mxu0 0
        %845 = vmatmul.mubr.bf16.gmra.mrb[0].mxu0 %v376
        %v846 = vpop.f32.mrb[0].mxu0
        %v847 = vadd.f32 %v718, %v846
        %v848 = vpop.f32.mrb[0].mxu0
        %v849 = vpop.f32.mrb[0].mxu0
        %v850 = vadd.f32 %v721, %v849
        %v851 = vpop.f32.mrb[0].mxu0
        %852 = vmatprep.mubr.bf16.mxu0 0
        %853 = vmatmul.mubr.bf16.gmra.mrb[0].mxu0 %v379
        %v854 = vpop.f32.mrb[0].mxu0
        %v855 = vadd.f32 %v726, %v854
        %v856 = vpop.f32.mrb[0].mxu0
        %v857 = vpop.f32.mrb[0].mxu0
        %v858 = vadd.f32 %v729, %v857
        %v859 = vpop.f32.mrb[0].mxu0
        %860 = vdwg.mxu0
        %v861 = vadd.f32 %v435, %v767
        %v862 = vadd.f32 %v436, %v770
        %v863 = vadd.f32 %v437, %v775
        %v864 = vadd.f32 %v438, %v778
        %v865 = vadd.f32 %v439, %v783
        %v866 = vadd.f32 %v440, %v786
        %v867 = vadd.f32 %v441, %v791
        %v868 = vadd.f32 %v442, %v794
        %v869 = vadd.f32 %v443, %v799
        %v870 = vadd.f32 %v444, %v802
        %v871 = vadd.f32 %v445, %v807
        %v872 = vadd.f32 %v446, %v810
        %v873 = vadd.f32 %v447, %v815
        %v874 = vadd.f32 %v448, %v818
        %v875 = vadd.f32 %v449, %v823
        %v876 = vadd.f32 %v450, %v826
        %v877 = vadd.f32 %v451, %v831
        %v878 = vadd.f32 %v452, %v834
        %v879 = vadd.f32 %v453, %v839
        %v880 = vadd.f32 %v454, %v842
        %v881 = vadd.f32 %v455, %v847
        %v882 = vadd.f32 %v456, %v850
        %v883 = vadd.f32 %v457, %v855
        %v884 = vadd.f32 %v458, %v858
        %885 = vst [vmem:[%s229] sm:$0xff] %v861
        %886 = vst [vmem:[%s229 + $0x8] sm:$0xff] %v862
        %887 = vst [vmem:[%s229 + $0x10] sm:$0xff] %v863
        %888 = vst [vmem:[%s229 + $0x18] sm:$0xff] %v864
        %889 = vst [vmem:[%s229 + $0x20] sm:$0xff] %v865
        %890 = vst [vmem:[%s229 + $0x28] sm:$0xff] %v866
        %891 = vst [vmem:[%s229 + $0x30] sm:$0xff] %v867
        %892 = vst [vmem:[%s229 + $0x38] sm:$0xff] %v868
        %893 = vst [vmem:[%s229 + $0x40] sm:$0xff] %v869
        %894 = vst [vmem:[%s229 + $0x48] sm:$0xff] %v870
        %895 = vst [vmem:[%s229 + $0x50] sm:$0xff] %v871
        %896 = vst [vmem:[%s229 + $0x58] sm:$0xff] %v872
        %897 = vst [vmem:[%s229 + $0x60] sm:$0xff] %v873
        %898 = vst [vmem:[%s229 + $0x68] sm:$0xff] %v874
        %899 = vst [vmem:[%s229 + $0x70] sm:$0xff] %v875
        %900 = vst [vmem:[%s229 + $0x78] sm:$0xff] %v876
        %901 = vst [vmem:[%s229 + $0x80] sm:$0xff] %v877
        %902 = vst [vmem:[%s229 + $0x88] sm:$0xff] %v878
        %903 = vst [vmem:[%s229 + $0x90] sm:$0xff] %v879
        %904 = vst [vmem:[%s229 + $0x98] sm:$0xff] %v880
        %905 = vst [vmem:[%s229 + $0xa0] sm:$0xff] %v881
        %906 = vst [vmem:[%s229 + $0xa8] sm:$0xff] %v882
        %907 = vst [vmem:[%s229 + $0xb0] sm:$0xff] %v883
        %908 = vst [vmem:[%s229 + $0xb8] sm:$0xff] %v884
      $region40: #{graph_convolution.3} parent=31 // pred_fallthru
        _
      %s909 = smul.u32 24, %s30
      %p910 = scmp.lt.s32.totalorder %s909, 47
      %s911 = scalar_select %p910, %s909, 47
      %s912 = smul.addr %s911, 8
      %s913 = scalar_lea.vmem %s5, %s912
      // Predicated region
      $region41: #{graph_convolution.3} parent=31 // pred_check
        %p914 = pneg %p130
      $region42: #{graph_convolution.3} parent=31 // pred_check_branch
        %916 = sbr.rel (%p914) target = $region44
      $region43: #{graph_convolution.3} parent=31 // pred_region
        %s917 = smul.u32 24, %s30
      $region44: #{graph_convolution.3} parent=31 // pred_fallthru
        _
    $region32: #{graph_convolution.3} parent=5 // pred_fallthru
      _
    %p918 = scmp.le.s32.totalorder 2, %s21
    // Predicated region
    $region45: #{graph_convolution.3} parent=5 // pred_check
      %p919 = pneg %p918
    $region46: #{graph_convolution.3} parent=5 // pred_check_branch
      %921 = sbr.rel (%p919) target = $region48
    $region47: #{graph_convolution.3} parent=5 // pred_region
      %s922 = ssub.s32 %s21, 2
      // Predicated region
      $region49: #{graph_convolution.3} parent=47 // pred_check
        %p923 = pneg %p136
      $region50: #{graph_convolution.3} parent=47 // pred_check_branch
        %925 = sbr.rel (%p923) target = $region52
      $region51: #{graph_convolution.3} parent=47 // pred_region
        %s926 = smul.u32 24, %s32
        %p927 = scmp.lt.s32.totalorder %s926, 47
        %s928 = scalar_select %p927, %s926, 47
        %s929 = smul.addr %s928, 8
        %s930 = scalar_lea.vmem %s5, %s929
      $region52: #{graph_convolution.3} parent=47 // pred_fallthru
        _
    $region48: #{graph_convolution.3} parent=5 // pred_fallthru
      _
  $region6: #{graph_convolution.3} parent=0 // loop_footer
    %s25 = sadd.s32 1, %s21
  $region7: #{graph_convolution.3} parent=0 // loop_footer_branch
    %20 = sbr.rel target = $region3
  $region8: #{graph_convolution.3} parent=0 // loop_exit
    _

</llo_original>
